<compile_context>
chip_gen: v7x
topology: tpu7x:2x2x1
jax: 0.10.0
libtpu: 0.0.40
codegen_flags: <defaults>
</compile_context>

<pallas_src>
import jax
import jax.numpy as jnp
from jax.experimental import pallas as pl
from jax.experimental.pallas import tpu as pltpu

# ----------------------------- model dims ----------------------------------
TILE_B = 16       # samples processed per grid step
NUM_TILES = 4     # grid size in the demo -> total batch 64
TOTAL_B = TILE_B * NUM_TILES

N_INPUT = 16      # number of graph nodes / input features
N_ENC_1 = 32
N_ENC_2 = 16
N_Z = 8
N_DEC_1 = 32
N_DEC_2 = 16
N_CLUSTERS = 4
HIDDEN_DIM = 256  # discriminator hidden (AAE_GCN default)
ALPHA = 1.0       # GDEC hard-codes self.alpha = 1.0 (so q**((alpha+1)/2)==q)

LEAKY_SLOPE = 0.01  # PyTorch F.leaky_relu / nn.LeakyReLU default
LANE = 128
F32 = jnp.float32
BF16 = jnp.bfloat16


# --------------------------- packed-buffer layouts ---------------------------
def _pad8(n):
    return (n + 7) // 8 * 8


def _build_layout(specs):
    layout, row = {}, 0
    for name, (r, c) in specs:
        layout[name] = (row, r, c)        # (row_start, rows, cols), static
        row += _pad8(r)                   # keep every section sublane-aligned
    return layout, row


# Per-tile runtime data (x, noise, z_real) packed into (DATA_ROWS, 128) rows.
DATA_SPECS = [
    ("x", (TILE_B, N_INPUT)),
    ("noise", (TILE_B, N_INPUT)),
    ("z_real", (TILE_B, N_Z)),
]
DATA_LAYOUT, DATA_ROWS = _build_layout(DATA_SPECS)      # 48 rows per tile

# Constant narrow weights/biases + (pre-scaled) adjacency + cluster centers.
SMALLW_SPECS = [
    ("a_t", (N_INPUT, N_INPUT)),
    ("e1_w", (N_INPUT, N_ENC_1)),  ("e1_b", (1, N_ENC_1)),
    ("e2_w", (N_ENC_1, N_ENC_2)),  ("e2_b", (1, N_ENC_2)),
    ("e3_w", (N_ENC_2, N_Z)),      ("e3_b", (1, N_Z)),
    ("de1_w", (N_Z, N_DEC_2)),     ("de1_b", (1, N_DEC_2)),
    ("de2_w", (N_DEC_2, N_DEC_1)), ("de2_b", (1, N_DEC_1)),
    ("de3_w", (N_DEC_1, N_INPUT)), ("de3_b", (1, N_INPUT)),
    ("cluster_t", (N_Z, N_CLUSTERS)),
]
SMALLW_LAYOUT, SMALLW_ROWS = _build_layout(SMALLW_SPECS)

# Wide f32 buffer (16, 256):
#   row 0: q1_b, row 1: q2_b, row 2: q3_w^T,
#   row 3: gcn_b replicated, row 4: q3_b replicated, rows 5-7: zero pad,
#   rows 8..15: q1_w (N_Z, 256) — sublane-tile aligned f32 block.
WIDE_ROWS = 16
GCN_B_ROW = 3
Q3_B_ROW = 4
Q1W_ROW = 8

# Output slab column layout (single lane-dense (TILE_B, 128) block per tile).
OUT_XBAR = 0
OUT_Q = N_INPUT
OUT_DREAL = N_INPUT + N_CLUSTERS
OUT_DFAKE = OUT_DREAL + 1
OUT_USED = OUT_DFAKE + 1


# ------------------------------ kernel --------------------------------------
def gdec_kernel(data_ref, sw_ref, wide_ref, q2w_ref, out_ref):
    def lrelu(v):
        return jnp.where(v > 0, v, LEAKY_SLOPE * v)

    def sw(name):
        r0, r, c = SMALLW_LAYOUT[name]
        return sw_ref[r0:r0 + r, 0:c]

    def dat(name):
        r0, r, c = DATA_LAYOUT[name]
        return data_ref[r0:r0 + r, 0:c]

    def linear(v, wname, bname):
        return jnp.dot(v, sw(wname), preferred_element_type=F32) + sw(bname)

    gcn_b = wide_ref[GCN_B_ROW:GCN_B_ROW + 1, 0:N_INPUT]   # (1, N_INPUT)
    q3_b = wide_ref[Q3_B_ROW:Q3_B_ROW + 1, 0:1]            # (1, 1)

    # --- AAE_GCN: data = data + randn*0.1 ; per-sample GCNConv(1,1,improved) ---
    # gcn_w folded into a_t at pack time -> y = xn @ (w * A_norm^T) + b.
    xn = dat("x") + dat("noise") * 0.1
    gcn_out = lrelu(jnp.dot(xn, sw("a_t"), preferred_element_type=F32) + gcn_b)

    # --- encoder ---
    enc_h1 = lrelu(linear(gcn_out, "e1_w", "e1_b"))
    enc_h2 = lrelu(linear(enc_h1, "e2_w", "e2_b"))
    z = lrelu(linear(enc_h2, "e3_w", "e3_b"))              # enc_h3 == z

    # --- decoder (PyTorch applies leaky_relu to dec_3's output as well) ---
    dec_h1 = lrelu(linear(z, "de1_w", "de1_b"))
    dec_h2 = lrelu(linear(dec_h1, "de2_w", "de2_b"))
    x_bar = lrelu(linear(dec_h2, "de3_w", "de3_b"))

    # --- discriminator: one fused pass over [z_real ; z] -> (2*TILE_B, 1) ----
    zz = jnp.concatenate([dat("z_real"), z], axis=0)       # (2*TILE_B, N_Z) f32
    q1_b = wide_ref[0:1, :]                                 # (1, 256) f32
    q2_b = wide_ref[1:2, :]
    q3_w_t = wide_ref[2:3, :]

    # q1 layer (K=8): 8 unrolled VPU broadcast-FMAs in f32.  No MXU round trip
    # on the critical path into the q2 matmul, no bf16 cast of zz.
    h1 = jnp.broadcast_to(q1_b, (2 * TILE_B, HIDDEN_DIM))
    for k in range(N_Z):
        h1 = h1 + zz[:, k:k + 1] * wide_ref[Q1W_ROW + k:Q1W_ROW + k + 1, :]
    h1 = lrelu(h1)

    # q2 layer (256x256) on the MXU, bf16 weights, f32 accumulation.
    h2 = lrelu(jnp.dot(h1.astype(BF16), q2w_ref[...],
                       preferred_element_type=F32) + q2_b)

    # 256 -> 1 projection as VPU multiply + lane reduce (skip an MXU pass
    # that would fill only 1/128 output lanes).
    logit = jnp.sum(h2 * q3_w_t, axis=-1, keepdims=True) + q3_b   # (2B, 1)
    d = 1.0 / (1.0 + jnp.exp(-logit))                              # exact sigmoid
    d_real = d[0:TILE_B, :]
    d_fake = d[TILE_B:2 * TILE_B, :]

    # --- student-t cluster assignment q -------------------------------------
    clus_t = sw("cluster_t")                                       # (N_Z, C)
    z2 = jnp.sum(z * z, axis=1, keepdims=True)                     # (B, 1)
    c2 = jnp.sum(clus_t * clus_t, axis=0, keepdims=True)           # (1, C)
    cross = jnp.dot(z, clus_t, preferred_element_type=F32)         # (B, C)
    dist = jnp.maximum(z2 + c2 - 2.0 * cross, 0.0)                 # clamp fp noise
    q = 1.0 / (1.0 + dist / ALPHA)
    # q ** ((alpha+1)/2) omitted: GDEC fixes alpha = 1.0 -> exponent is 1.
    q = q / jnp.sum(q, axis=1, keepdims=True)                      # exact norm

    # --- single lane-dense (TILE_B, 128) output slab (one unmasked store) ---
    pad = jnp.zeros((TILE_B, LANE - OUT_USED), F32)
    out_ref[...] = jnp.concatenate([x_bar, q, d_real, d_fake, pad], axis=-1)


# ------------------------------ wrapper --------------------------------------
def _pad_lane(a):
    return jnp.pad(a, ((0, 0), (0, LANE - a.shape[1])))


def _cost_estimate(num_tiles):
    small_matmul_k_n = (N_INPUT * N_INPUT + N_INPUT * N_ENC_1
                        + N_ENC_1 * N_ENC_2 + N_ENC_2 * N_Z
                        + N_Z * N_DEC_2 + N_DEC_2 * N_DEC_1
                        + N_DEC_1 * N_INPUT + N_Z * N_CLUSTERS)
    per_tile_flops = (2 * (2 * TILE_B) * HIDDEN_DIM * HIDDEN_DIM   # q2 matmul
                      + 2 * (2 * TILE_B) * N_Z * HIDDEN_DIM        # q1 FMAs
                      + 2 * (2 * TILE_B) * HIDDEN_DIM              # q3 reduce
                      + 2 * TILE_B * small_matmul_k_n)
    bytes_accessed = (num_tiles * (DATA_ROWS + TILE_B) * LANE * 4  # data + out
                      + SMALLW_ROWS * LANE * 4
                      + WIDE_ROWS * HIDDEN_DIM * 4
                      + HIDDEN_DIM * HIDDEN_DIM * 2)               # bf16 q2_w
    return pl.CostEstimate(flops=int(num_tiles * per_tile_flops),
                           transcendentals=int(num_tiles * 2 * TILE_B),
                           bytes_accessed=int(bytes_accessed))


@jax.jit
def gdec_forward(x, noise, z_real, small_w, wide_w, q2_w):
    total_b = x.shape[0]
    assert total_b % TILE_B == 0
    num_tiles = total_b // TILE_B

    # One fused pack (pad + concat + reshape) inside the same jit as the
    # pallas_call: per-tile row order is [x ; noise ; z_real], lane-padded.
    x3 = _pad_lane(x).reshape(num_tiles, TILE_B, LANE)
    n3 = _pad_lane(noise).reshape(num_tiles, TILE_B, LANE)
    z3 = _pad_lane(z_real).reshape(num_tiles, TILE_B, LANE)
    data_buf = jnp.concatenate([x3, n3, z3], axis=1).reshape(
        num_tiles * DATA_ROWS, LANE)

    grid_spec = pltpu.PrefetchScalarGridSpec(
        num_scalar_prefetch=0,
        grid=(num_tiles,),
        in_specs=[
            # per-tile data block: auto double-buffered across the grid
            pl.BlockSpec((DATA_ROWS, LANE), lambda i: (i, 0)),
            # constant weights: same block every step -> DMA'd once, resident
            pl.BlockSpec((SMALLW_ROWS, LANE), lambda i: (0, 0)),
            pl.BlockSpec((WIDE_ROWS, HIDDEN_DIM), lambda i: (0, 0)),
            pl.BlockSpec((HIDDEN_DIM, HIDDEN_DIM), lambda i: (0, 0)),
        ],
        out_specs=pl.BlockSpec((TILE_B, LANE), lambda i: (i, 0)),
    )

    slab = pl.pallas_call(
        gdec_kernel,
        out_shape=jax.ShapeDtypeStruct((total_b, LANE), F32),
        grid_spec=grid_spec,
        compiler_params=pltpu.CompilerParams(
            dimension_semantics=("parallel",)),   # v7x: shard tiles over 2 TCs
        cost_estimate=_cost_estimate(num_tiles),
    )(data_buf, small_w, wide_w, q2_w)

    x_bar = slab[:, OUT_XBAR:OUT_XBAR + N_INPUT]
    q = slab[:, OUT_Q:OUT_Q + N_CLUSTERS]
    d_real = slab[:, OUT_DREAL:OUT_DREAL + 1]
    d_fake = slab[:, OUT_DFAKE:OUT_DFAKE + 1]
    return x_bar, q, d_real, d_fake


# -------------------------- parameter / graph setup ---------------------------
def make_params(key):
    """Deterministic synthetic parameters (xavier-ish scale 0.1)."""
    def lin(key, din, dout):
        kw, kb = jax.random.split(key)
        w = jax.random.normal(kw, (din, dout), F32) * 0.1
        b = jax.random.normal(kb, (1, dout), F32) * 0.01
        return w, b

    keys = jax.random.split(key, 12)
    p = {}
    p["gcn_w"] = jax.random.normal(keys[0], (1, 1), F32) * 0.5 + 1.0
    p["gcn_b"] = jax.random.normal(keys[1], (1, 1), F32) * 0.01
    p["e1_w"], p["e1_b"] = lin(keys[2], N_INPUT, N_ENC_1)
    p["e2_w"], p["e2_b"] = lin(keys[3], N_ENC_1, N_ENC_2)
    p["e3_w"], p["e3_b"] = lin(keys[4], N_ENC_2, N_Z)
    p["de1_w"], p["de1_b"] = lin(keys[5], N_Z, N_DEC_2)
    p["de2_w"], p["de2_b"] = lin(keys[6], N_DEC_2, N_DEC_1)
    p["de3_w"], p["de3_b"] = lin(keys[7], N_DEC_1, N_INPUT)
    p["q1_w"], p["q1_b"] = lin(keys[8], N_Z, HIDDEN_DIM)
    p["q2_w"], p["q2_b"] = lin(keys[9], HIDDEN_DIM, HIDDEN_DIM)
    p["q3_w"], p["q3_b"] = lin(keys[10], HIDDEN_DIM, 1)
    return p


def make_normalized_adjacency(n_nodes):
    """Dense D^{-1/2}(A + 2I)D^{-1/2} for a ring graph (GCNConv improved=True)."""
    idx = jnp.arange(n_nodes)
    a = jnp.zeros((n_nodes, n_nodes), F32)
    a = a.at[idx, (idx + 1) % n_nodes].set(1.0)
    a = a.at[(idx + 1) % n_nodes, idx].set(1.0)
    a = a + 2.0 * jnp.eye(n_nodes, dtype=F32)    # improved self-loops
    deg = jnp.sum(a, axis=1)
    d_inv_sqrt = 1.0 / jnp.sqrt(deg)
    return d_inv_sqrt[:, None] * a * d_inv_sqrt[None, :]


def pack_constants(params, a_norm_t, cluster_t):
    """One-time coalescing of all constant tensors into 3 packed buffers."""
    consts = dict(params)
    # Fold the scalar GCNConv weight into the transposed normalized adjacency.
    consts["a_t"] = a_norm_t * params["gcn_w"][0, 0]
    consts["cluster_t"] = cluster_t

    small_w = jnp.zeros((SMALLW_ROWS, LANE), F32)
    for name, (r0, r, c) in SMALLW_LAYOUT.items():
        small_w = small_w.at[r0:r0 + r, :c].set(consts[name])

    wide_w = jnp.zeros((WIDE_ROWS, HIDDEN_DIM), F32)
    wide_w = wide_w.at[0, :].set(params["q1_b"][0])
    wide_w = wide_w.at[1, :].set(params["q2_b"][0])
    wide_w = wide_w.at[2, :].set(params["q3_w"][:, 0])                 # q3_w^T
    wide_w = wide_w.at[GCN_B_ROW, :].set(
        jnp.full((HIDDEN_DIM,), params["gcn_b"][0, 0], F32))
    wide_w = wide_w.at[Q3_B_ROW, :].set(
        jnp.full((HIDDEN_DIM,), params["q3_b"][0, 0], F32))
    wide_w = wide_w.at[Q1W_ROW:Q1W_ROW + N_Z, :].set(params["q1_w"])   # f32 q1

    q2_w = params["q2_w"].astype(BF16)
    return small_w, wide_w, q2_w


# --------------------------------- main ---------------------------------------
if __name__ == "__main__":
    key = jax.random.PRNGKey(0)
    k_x, k_noise, k_zreal, k_clus, k_params = jax.random.split(key, 5)

    x = jax.random.normal(k_x, (TOTAL_B, N_INPUT), F32)
    # torch.randn noise (scaled by 0.1 in-kernel) and z_real passed as inputs.
    noise = jax.random.normal(k_noise, (TOTAL_B, N_INPUT), F32)
    z_real = jax.random.normal(k_zreal, (TOTAL_B, N_Z), F32)
    # cluster_layer ~ xavier_normal_((n_clusters, n_z)); stored transposed.
    cluster_t = (jax.random.normal(k_clus, (N_Z, N_CLUSTERS), F32)
                 * jnp.sqrt(2.0 / (N_CLUSTERS + N_Z)))

    params = make_params(k_params)
    a_norm_t = make_normalized_adjacency(N_INPUT).T   # kernel does x @ (w*A^T)

    small_w, wide_w, q2_w = pack_constants(params, a_norm_t, cluster_t)

    x_bar, q, d_real, d_fake = gdec_forward(x, noise, z_real,
                                            small_w, wide_w, q2_w)
    jax.block_until_ready((x_bar, q, d_real, d_fake))

    assert x_bar.shape == (TOTAL_B, N_INPUT)
    assert q.shape == (TOTAL_B, N_CLUSTERS)
    assert d_real.shape == (TOTAL_B, 1) and d_fake.shape == (TOTAL_B, 1)
    assert bool(jnp.all(jnp.isfinite(x_bar)))
    assert bool(jnp.all(jnp.isfinite(d_real))) and bool(jnp.all(jnp.isfinite(d_fake)))
    assert bool(jnp.all((d_real > 0) & (d_real < 1)))
    assert bool(jnp.all((d_fake > 0) & (d_fake < 1)))
    # q normalization now uses exact division -> tight tolerance.
    assert bool(jnp.allclose(jnp.sum(q, axis=1), 1.0, atol=1e-4))

    print("KERNEL_OK")
</pallas_src>

<mosaic_0001>
module attributes {stable_mosaic.version = 11 : i64} {
  func.func @gdec_kernel(%arg0: i32, %arg1: memref<48x128xf32, #tpu.memory_space<vmem>>, %arg2: memref<192x128xf32, #tpu.memory_space<vmem>>, %arg3: memref<16x256xf32, #tpu.memory_space<vmem>>, %arg4: memref<256x256xbf16, #tpu.memory_space<vmem>>, %arg5: memref<16x128xf32, #tpu.memory_space<vmem>>) attributes {dimension_semantics = [#tpu.dimension_semantics<parallel>], iteration_bounds = array<i64: 4>, scalar_prefetch = 0 : i64, scratch_operands = 0 : i64, tpu.core_type = #tpu.core_type<tc>, window_params = [{transform_indices = @transform_0, window_bounds = array<i64: 48, 128>}, {pipeline_mode = #tpu.pipeline_mode<synchronous>, transform_indices = @transform_1, window_bounds = array<i64: 192, 128>}, {pipeline_mode = #tpu.pipeline_mode<synchronous>, transform_indices = @transform_2, window_bounds = array<i64: 16, 256>}, {pipeline_mode = #tpu.pipeline_mode<synchronous>, transform_indices = @transform_3, window_bounds = array<i64: 256, 256>}, {transform_indices = @transform_4, window_bounds = array<i64: 16, 128>}]} {
    %c3 = arith.constant 3 : index
    %c0 = arith.constant 0 : index
    %0 = vector.load %arg3[%c3, %c0] : memref<16x256xf32, #tpu.memory_space<vmem>>, vector<1x16xf32>
    %c4 = arith.constant 4 : index
    %c0_0 = arith.constant 0 : index
    %1 = vector.load %arg3[%c4, %c0_0] : memref<16x256xf32, #tpu.memory_space<vmem>>, vector<1x1xf32>
    %c0_1 = arith.constant 0 : index
    %c0_2 = arith.constant 0 : index
    %2 = vector.load %arg1[%c0_1, %c0_2] : memref<48x128xf32, #tpu.memory_space<vmem>>, vector<16x16xf32>
    %c16 = arith.constant 16 : index
    %c0_3 = arith.constant 0 : index
    %3 = vector.load %arg1[%c16, %c0_3] : memref<48x128xf32, #tpu.memory_space<vmem>>, vector<16x16xf32>
    %cst = arith.constant 1.000000e-01 : f32
    %4 = vector.broadcast %cst : f32 to vector<16x16xf32>
    %5 = arith.mulf %3, %4 : vector<16x16xf32>
    %6 = arith.addf %2, %5 : vector<16x16xf32>
    %c0_4 = arith.constant 0 : index
    %c0_5 = arith.constant 0 : index
    %7 = vector.load %arg2[%c0_4, %c0_5] : memref<192x128xf32, #tpu.memory_space<vmem>>, vector<16x16xf32>
    %cst_6 = arith.constant dense<0.000000e+00> : vector<16x16xf32>
    %8 = tpu.matmul %6, %7, %cst_6 {dimension_numbers = #tpu.dot_dimension_numbers<[1], [0], [0], [1], [0, 0, 1, 1], [], []>} : vector<16x16xf32>, vector<16x16xf32>, vector<16x16xf32> -> vector<16x16xf32>
    %9 = vector.broadcast %0 : vector<1x16xf32> to vector<16x16xf32>
    %10 = arith.addf %8, %9 : vector<16x16xf32>
    %cst_7 = arith.constant 0.000000e+00 : f32
    %11 = vector.broadcast %cst_7 : f32 to vector<16x16xf32>
    %12 = arith.cmpf ogt, %10, %11 : vector<16x16xf32>
    %cst_8 = arith.constant 0.00999999977 : f32
    %13 = vector.broadcast %cst_8 : f32 to vector<16x16xf32>
    %14 = arith.mulf %13, %10 : vector<16x16xf32>
    %15 = arith.select %12, %10, %14 : vector<16x16xi1>, vector<16x16xf32>
    %c16_9 = arith.constant 16 : index
    %c0_10 = arith.constant 0 : index
    %16 = vector.load %arg2[%c16_9, %c0_10] : memref<192x128xf32, #tpu.memory_space<vmem>>, vector<16x32xf32>
    %cst_11 = arith.constant dense<0.000000e+00> : vector<16x32xf32>
    %17 = tpu.matmul %15, %16, %cst_11 {dimension_numbers = #tpu.dot_dimension_numbers<[1], [0], [0], [1], [0, 0, 1, 1], [], []>} : vector<16x16xf32>, vector<16x32xf32>, vector<16x32xf32> -> vector<16x32xf32>
    %c32 = arith.constant 32 : index
    %c0_12 = arith.constant 0 : index
    %18 = vector.load %arg2[%c32, %c0_12] : memref<192x128xf32, #tpu.memory_space<vmem>>, vector<1x32xf32>
    %19 = vector.broadcast %18 : vector<1x32xf32> to vector<16x32xf32>
    %20 = arith.addf %17, %19 : vector<16x32xf32>
    %cst_13 = arith.constant 0.000000e+00 : f32
    %21 = vector.broadcast %cst_13 : f32 to vector<16x32xf32>
    %22 = arith.cmpf ogt, %20, %21 : vector<16x32xf32>
    %cst_14 = arith.constant 0.00999999977 : f32
    %23 = vector.broadcast %cst_14 : f32 to vector<16x32xf32>
    %24 = arith.mulf %23, %20 : vector<16x32xf32>
    %25 = arith.select %22, %20, %24 : vector<16x32xi1>, vector<16x32xf32>
    %c40 = arith.constant 40 : index
    %c0_15 = arith.constant 0 : index
    %26 = vector.load %arg2[%c40, %c0_15] : memref<192x128xf32, #tpu.memory_space<vmem>>, vector<32x16xf32>
    %cst_16 = arith.constant dense<0.000000e+00> : vector<16x16xf32>
    %27 = tpu.matmul %25, %26, %cst_16 {dimension_numbers = #tpu.dot_dimension_numbers<[1], [0], [0], [1], [0, 0, 1, 1], [], []>} : vector<16x32xf32>, vector<32x16xf32>, vector<16x16xf32> -> vector<16x16xf32>
    %c72 = arith.constant 72 : index
    %c0_17 = arith.constant 0 : index
    %28 = vector.load %arg2[%c72, %c0_17] : memref<192x128xf32, #tpu.memory_space<vmem>>, vector<1x16xf32>
    %29 = vector.broadcast %28 : vector<1x16xf32> to vector<16x16xf32>
    %30 = arith.addf %27, %29 : vector<16x16xf32>
    %cst_18 = arith.constant 0.000000e+00 : f32
    %31 = vector.broadcast %cst_18 : f32 to vector<16x16xf32>
    %32 = arith.cmpf ogt, %30, %31 : vector<16x16xf32>
    %cst_19 = arith.constant 0.00999999977 : f32
    %33 = vector.broadcast %cst_19 : f32 to vector<16x16xf32>
    %34 = arith.mulf %33, %30 : vector<16x16xf32>
    %35 = arith.select %32, %30, %34 : vector<16x16xi1>, vector<16x16xf32>
    %c80 = arith.constant 80 : index
    %c0_20 = arith.constant 0 : index
    %36 = vector.load %arg2[%c80, %c0_20] : memref<192x128xf32, #tpu.memory_space<vmem>>, vector<16x8xf32>
    %cst_21 = arith.constant dense<0.000000e+00> : vector<16x8xf32>
    %37 = tpu.matmul %35, %36, %cst_21 {dimension_numbers = #tpu.dot_dimension_numbers<[1], [0], [0], [1], [0, 0, 1, 1], [], []>} : vector<16x16xf32>, vector<16x8xf32>, vector<16x8xf32> -> vector<16x8xf32>
    %c96 = arith.constant 96 : index
    %c0_22 = arith.constant 0 : index
    %38 = vector.load %arg2[%c96, %c0_22] : memref<192x128xf32, #tpu.memory_space<vmem>>, vector<1x8xf32>
    %39 = vector.broadcast %38 : vector<1x8xf32> to vector<16x8xf32>
    %40 = arith.addf %37, %39 : vector<16x8xf32>
    %cst_23 = arith.constant 0.000000e+00 : f32
    %41 = vector.broadcast %cst_23 : f32 to vector<16x8xf32>
    %42 = arith.cmpf ogt, %40, %41 : vector<16x8xf32>
    %cst_24 = arith.constant 0.00999999977 : f32
    %43 = vector.broadcast %cst_24 : f32 to vector<16x8xf32>
    %44 = arith.mulf %43, %40 : vector<16x8xf32>
    %45 = arith.select %42, %40, %44 : vector<16x8xi1>, vector<16x8xf32>
    %c104 = arith.constant 104 : index
    %c0_25 = arith.constant 0 : index
    %46 = vector.load %arg2[%c104, %c0_25] : memref<192x128xf32, #tpu.memory_space<vmem>>, vector<8x16xf32>
    %cst_26 = arith.constant dense<0.000000e+00> : vector<16x16xf32>
    %47 = tpu.matmul %45, %46, %cst_26 {dimension_numbers = #tpu.dot_dimension_numbers<[1], [0], [0], [1], [0, 0, 1, 1], [], []>} : vector<16x8xf32>, vector<8x16xf32>, vector<16x16xf32> -> vector<16x16xf32>
    %c112 = arith.constant 112 : index
    %c0_27 = arith.constant 0 : index
    %48 = vector.load %arg2[%c112, %c0_27] : memref<192x128xf32, #tpu.memory_space<vmem>>, vector<1x16xf32>
    %49 = vector.broadcast %48 : vector<1x16xf32> to vector<16x16xf32>
    %50 = arith.addf %47, %49 : vector<16x16xf32>
    %cst_28 = arith.constant 0.000000e+00 : f32
    %51 = vector.broadcast %cst_28 : f32 to vector<16x16xf32>
    %52 = arith.cmpf ogt, %50, %51 : vector<16x16xf32>
    %cst_29 = arith.constant 0.00999999977 : f32
    %53 = vector.broadcast %cst_29 : f32 to vector<16x16xf32>
    %54 = arith.mulf %53, %50 : vector<16x16xf32>
    %55 = arith.select %52, %50, %54 : vector<16x16xi1>, vector<16x16xf32>
    %c120 = arith.constant 120 : index
    %c0_30 = arith.constant 0 : index
    %56 = vector.load %arg2[%c120, %c0_30] : memref<192x128xf32, #tpu.memory_space<vmem>>, vector<16x32xf32>
    %cst_31 = arith.constant dense<0.000000e+00> : vector<16x32xf32>
    %57 = tpu.matmul %55, %56, %cst_31 {dimension_numbers = #tpu.dot_dimension_numbers<[1], [0], [0], [1], [0, 0, 1, 1], [], []>} : vector<16x16xf32>, vector<16x32xf32>, vector<16x32xf32> -> vector<16x32xf32>
    %c136 = arith.constant 136 : index
    %c0_32 = arith.constant 0 : index
    %58 = vector.load %arg2[%c136, %c0_32] : memref<192x128xf32, #tpu.memory_space<vmem>>, vector<1x32xf32>
    %59 = vector.broadcast %58 : vector<1x32xf32> to vector<16x32xf32>
    %60 = arith.addf %57, %59 : vector<16x32xf32>
    %cst_33 = arith.constant 0.000000e+00 : f32
    %61 = vector.broadcast %cst_33 : f32 to vector<16x32xf32>
    %62 = arith.cmpf ogt, %60, %61 : vector<16x32xf32>
    %cst_34 = arith.constant 0.00999999977 : f32
    %63 = vector.broadcast %cst_34 : f32 to vector<16x32xf32>
    %64 = arith.mulf %63, %60 : vector<16x32xf32>
    %65 = arith.select %62, %60, %64 : vector<16x32xi1>, vector<16x32xf32>
    %c144 = arith.constant 144 : index
    %c0_35 = arith.constant 0 : index
    %66 = vector.load %arg2[%c144, %c0_35] : memref<192x128xf32, #tpu.memory_space<vmem>>, vector<32x16xf32>
    %cst_36 = arith.constant dense<0.000000e+00> : vector<16x16xf32>
    %67 = tpu.matmul %65, %66, %cst_36 {dimension_numbers = #tpu.dot_dimension_numbers<[1], [0], [0], [1], [0, 0, 1, 1], [], []>} : vector<16x32xf32>, vector<32x16xf32>, vector<16x16xf32> -> vector<16x16xf32>
    %c176 = arith.constant 176 : index
    %c0_37 = arith.constant 0 : index
    %68 = vector.load %arg2[%c176, %c0_37] : memref<192x128xf32, #tpu.memory_space<vmem>>, vector<1x16xf32>
    %69 = vector.broadcast %68 : vector<1x16xf32> to vector<16x16xf32>
    %70 = arith.addf %67, %69 : vector<16x16xf32>
    %cst_38 = arith.constant 0.000000e+00 : f32
    %71 = vector.broadcast %cst_38 : f32 to vector<16x16xf32>
    %72 = arith.cmpf ogt, %70, %71 : vector<16x16xf32>
    %cst_39 = arith.constant 0.00999999977 : f32
    %73 = vector.broadcast %cst_39 : f32 to vector<16x16xf32>
    %74 = arith.mulf %73, %70 : vector<16x16xf32>
    %75 = arith.select %72, %70, %74 : vector<16x16xi1>, vector<16x16xf32>
    %c32_40 = arith.constant 32 : index
    %c0_41 = arith.constant 0 : index
    %76 = vector.load %arg1[%c32_40, %c0_41] : memref<48x128xf32, #tpu.memory_space<vmem>>, vector<16x8xf32>
    %77 = tpu.concatenate %76, %45 in 0 : vector<16x8xf32>, vector<16x8xf32> -> vector<32x8xf32>
    %c0_42 = arith.constant 0 : index
    %c0_43 = arith.constant 0 : index
    %78 = vector.load %arg3[%c0_42, %c0_43] : memref<16x256xf32, #tpu.memory_space<vmem>>, vector<1x256xf32>
    %c1 = arith.constant 1 : index
    %c0_44 = arith.constant 0 : index
    %79 = vector.load %arg3[%c1, %c0_44] : memref<16x256xf32, #tpu.memory_space<vmem>>, vector<1x256xf32>
    %c2 = arith.constant 2 : index
    %c0_45 = arith.constant 0 : index
    %80 = vector.load %arg3[%c2, %c0_45] : memref<16x256xf32, #tpu.memory_space<vmem>>, vector<1x256xf32>
    %81 = vector.shape_cast %78 : vector<1x256xf32> to vector<1x256xf32>
    %82 = vector.broadcast %81 : vector<1x256xf32> to vector<32x256xf32>
    %83 = vector.extract_strided_slice %77 {offsets = [0, 0], sizes = [32, 1], strides = [1, 1]} : vector<32x8xf32> to vector<32x1xf32>
    %c8 = arith.constant 8 : index
    %c0_46 = arith.constant 0 : index
    %84 = vector.load %arg3[%c8, %c0_46] : memref<16x256xf32, #tpu.memory_space<vmem>>, vector<1x256xf32>
    %85 = vector.broadcast %83 : vector<32x1xf32> to vector<32x256xf32>
    %86 = vector.broadcast %84 : vector<1x256xf32> to vector<32x256xf32>
    %87 = arith.mulf %85, %86 : vector<32x256xf32>
    %88 = arith.addf %82, %87 : vector<32x256xf32>
    %89 = vector.extract_strided_slice %77 {offsets = [0, 1], sizes = [32, 1], strides = [1, 1]} : vector<32x8xf32> to vector<32x1xf32>
    %c9 = arith.constant 9 : index
    %c0_47 = arith.constant 0 : index
    %90 = vector.load %arg3[%c9, %c0_47] : memref<16x256xf32, #tpu.memory_space<vmem>>, vector<1x256xf32>
    %91 = vector.broadcast %89 : vector<32x1xf32> to vector<32x256xf32>
    %92 = vector.broadcast %90 : vector<1x256xf32> to vector<32x256xf32>
    %93 = arith.mulf %91, %92 : vector<32x256xf32>
    %94 = arith.addf %88, %93 : vector<32x256xf32>
    %95 = vector.extract_strided_slice %77 {offsets = [0, 2], sizes = [32, 1], strides = [1, 1]} : vector<32x8xf32> to vector<32x1xf32>
    %c10 = arith.constant 10 : index
    %c0_48 = arith.constant 0 : index
    %96 = vector.load %arg3[%c10, %c0_48] : memref<16x256xf32, #tpu.memory_space<vmem>>, vector<1x256xf32>
    %97 = vector.broadcast %95 : vector<32x1xf32> to vector<32x256xf32>
    %98 = vector.broadcast %96 : vector<1x256xf32> to vector<32x256xf32>
    %99 = arith.mulf %97, %98 : vector<32x256xf32>
    %100 = arith.addf %94, %99 : vector<32x256xf32>
    %101 = vector.extract_strided_slice %77 {offsets = [0, 3], sizes = [32, 1], strides = [1, 1]} : vector<32x8xf32> to vector<32x1xf32>
    %c11 = arith.constant 11 : index
    %c0_49 = arith.constant 0 : index
    %102 = vector.load %arg3[%c11, %c0_49] : memref<16x256xf32, #tpu.memory_space<vmem>>, vector<1x256xf32>
    %103 = vector.broadcast %101 : vector<32x1xf32> to vector<32x256xf32>
    %104 = vector.broadcast %102 : vector<1x256xf32> to vector<32x256xf32>
    %105 = arith.mulf %103, %104 : vector<32x256xf32>
    %106 = arith.addf %100, %105 : vector<32x256xf32>
    %107 = vector.extract_strided_slice %77 {offsets = [0, 4], sizes = [32, 1], strides = [1, 1]} : vector<32x8xf32> to vector<32x1xf32>
    %c12 = arith.constant 12 : index
    %c0_50 = arith.constant 0 : index
    %108 = vector.load %arg3[%c12, %c0_50] : memref<16x256xf32, #tpu.memory_space<vmem>>, vector<1x256xf32>
    %109 = vector.broadcast %107 : vector<32x1xf32> to vector<32x256xf32>
    %110 = vector.broadcast %108 : vector<1x256xf32> to vector<32x256xf32>
    %111 = arith.mulf %109, %110 : vector<32x256xf32>
    %112 = arith.addf %106, %111 : vector<32x256xf32>
    %113 = vector.extract_strided_slice %77 {offsets = [0, 5], sizes = [32, 1], strides = [1, 1]} : vector<32x8xf32> to vector<32x1xf32>
    %c13 = arith.constant 13 : index
    %c0_51 = arith.constant 0 : index
    %114 = vector.load %arg3[%c13, %c0_51] : memref<16x256xf32, #tpu.memory_space<vmem>>, vector<1x256xf32>
    %115 = vector.broadcast %113 : vector<32x1xf32> to vector<32x256xf32>
    %116 = vector.broadcast %114 : vector<1x256xf32> to vector<32x256xf32>
    %117 = arith.mulf %115, %116 : vector<32x256xf32>
    %118 = arith.addf %112, %117 : vector<32x256xf32>
    %119 = vector.extract_strided_slice %77 {offsets = [0, 6], sizes = [32, 1], strides = [1, 1]} : vector<32x8xf32> to vector<32x1xf32>
    %c14 = arith.constant 14 : index
    %c0_52 = arith.constant 0 : index
    %120 = vector.load %arg3[%c14, %c0_52] : memref<16x256xf32, #tpu.memory_space<vmem>>, vector<1x256xf32>
    %121 = vector.broadcast %119 : vector<32x1xf32> to vector<32x256xf32>
    %122 = vector.broadcast %120 : vector<1x256xf32> to vector<32x256xf32>
    %123 = arith.mulf %121, %122 : vector<32x256xf32>
    %124 = arith.addf %118, %123 : vector<32x256xf32>
    %125 = vector.extract_strided_slice %77 {offsets = [0, 7], sizes = [32, 1], strides = [1, 1]} : vector<32x8xf32> to vector<32x1xf32>
    %c15 = arith.constant 15 : index
    %c0_53 = arith.constant 0 : index
    %126 = vector.load %arg3[%c15, %c0_53] : memref<16x256xf32, #tpu.memory_space<vmem>>, vector<1x256xf32>
    %127 = vector.broadcast %125 : vector<32x1xf32> to vector<32x256xf32>
    %128 = vector.broadcast %126 : vector<1x256xf32> to vector<32x256xf32>
    %129 = arith.mulf %127, %128 : vector<32x256xf32>
    %130 = arith.addf %124, %129 : vector<32x256xf32>
    %cst_54 = arith.constant 0.000000e+00 : f32
    %131 = vector.broadcast %cst_54 : f32 to vector<32x256xf32>
    %132 = arith.cmpf ogt, %130, %131 : vector<32x256xf32>
    %cst_55 = arith.constant 0.00999999977 : f32
    %133 = vector.broadcast %cst_55 : f32 to vector<32x256xf32>
    %134 = arith.mulf %133, %130 : vector<32x256xf32>
    %135 = arith.select %132, %130, %134 : vector<32x256xi1>, vector<32x256xf32>
    %136 = arith.truncf %135 : vector<32x256xf32> to vector<32x256xbf16>
    %c0_56 = arith.constant 0 : index
    %c0_57 = arith.constant 0 : index
    %137 = vector.load %arg4[%c0_56, %c0_57] : memref<256x256xbf16, #tpu.memory_space<vmem>>, vector<256x256xbf16>
    %cst_58 = arith.constant dense<0.000000e+00> : vector<32x256xf32>
    %138 = tpu.matmul %136, %137, %cst_58 {dimension_numbers = #tpu.dot_dimension_numbers<[1], [0], [0], [1], [0, 0, 1, 1], [], []>} : vector<32x256xbf16>, vector<256x256xbf16>, vector<32x256xf32> -> vector<32x256xf32>
    %139 = vector.broadcast %79 : vector<1x256xf32> to vector<32x256xf32>
    %140 = arith.addf %138, %139 : vector<32x256xf32>
    %cst_59 = arith.constant 0.000000e+00 : f32
    %141 = vector.broadcast %cst_59 : f32 to vector<32x256xf32>
    %142 = arith.cmpf ogt, %140, %141 : vector<32x256xf32>
    %cst_60 = arith.constant 0.00999999977 : f32
    %143 = vector.broadcast %cst_60 : f32 to vector<32x256xf32>
    %144 = arith.mulf %143, %140 : vector<32x256xf32>
    %145 = arith.select %142, %140, %144 : vector<32x256xi1>, vector<32x256xf32>
    %146 = vector.broadcast %80 : vector<1x256xf32> to vector<32x256xf32>
    %147 = arith.mulf %145, %146 : vector<32x256xf32>
    %cst_61 = arith.constant dense<0.000000e+00> : vector<32xf32>
    %148 = vector.multi_reduction <add>, %147, %cst_61 [1] : vector<32x256xf32> to vector<32xf32>
    %149 = vector.shape_cast %148 : vector<32xf32> to vector<32x1xf32>
    %150 = vector.broadcast %1 : vector<1x1xf32> to vector<32x1xf32>
    %151 = arith.addf %149, %150 : vector<32x1xf32>
    %cst_62 = arith.constant 0.000000e+00 : f32
    %152 = vector.broadcast %cst_62 : f32 to vector<32x1xf32>
    %153 = arith.subf %152, %151 : vector<32x1xf32>
    %154 = math.exp %153 : vector<32x1xf32>
    %cst_63 = arith.constant 1.000000e+00 : f32
    %155 = vector.broadcast %cst_63 : f32 to vector<32x1xf32>
    %156 = arith.addf %155, %154 : vector<32x1xf32>
    %cst_64 = arith.constant 1.000000e+00 : f32
    %157 = vector.broadcast %cst_64 : f32 to vector<32x1xf32>
    %158 = arith.divf %157, %156 : vector<32x1xf32>
    %159 = vector.extract_strided_slice %158 {offsets = [0, 0], sizes = [16, 1], strides = [1, 1]} : vector<32x1xf32> to vector<16x1xf32>
    %160 = vector.extract_strided_slice %158 {offsets = [16, 0], sizes = [16, 1], strides = [1, 1]} : vector<32x1xf32> to vector<16x1xf32>
    %c184 = arith.constant 184 : index
    %c0_65 = arith.constant 0 : index
    %161 = vector.load %arg2[%c184, %c0_65] : memref<192x128xf32, #tpu.memory_space<vmem>>, vector<8x4xf32>
    %162 = arith.mulf %45, %45 : vector<16x8xf32>
    %cst_66 = arith.constant dense<0.000000e+00> : vector<16xf32>
    %163 = vector.multi_reduction <add>, %162, %cst_66 [1] : vector<16x8xf32> to vector<16xf32>
    %164 = vector.shape_cast %163 : vector<16xf32> to vector<16x1xf32>
    %165 = arith.mulf %161, %161 : vector<8x4xf32>
    %cst_67 = arith.constant dense<0.000000e+00> : vector<4xf32>
    %166 = vector.multi_reduction <add>, %165, %cst_67 [0] : vector<8x4xf32> to vector<4xf32>
    %167 = vector.shape_cast %166 : vector<4xf32> to vector<1x4xf32>
    %cst_68 = arith.constant dense<0.000000e+00> : vector<16x4xf32>
    %168 = tpu.matmul %45, %161, %cst_68 {dimension_numbers = #tpu.dot_dimension_numbers<[1], [0], [0], [1], [0, 0, 1, 1], [], []>} : vector<16x8xf32>, vector<8x4xf32>, vector<16x4xf32> -> vector<16x4xf32>
    %169 = vector.broadcast %164 : vector<16x1xf32> to vector<16x4xf32>
    %170 = vector.broadcast %167 : vector<1x4xf32> to vector<16x4xf32>
    %171 = arith.addf %169, %170 : vector<16x4xf32>
    %cst_69 = arith.constant 2.000000e+00 : f32
    %172 = vector.broadcast %cst_69 : f32 to vector<16x4xf32>
    %173 = arith.mulf %172, %168 : vector<16x4xf32>
    %174 = arith.subf %171, %173 : vector<16x4xf32>
    %cst_70 = arith.constant 0.000000e+00 : f32
    %175 = vector.broadcast %cst_70 : f32 to vector<16x4xf32>
    %176 = arith.maximumf %174, %175 : vector<16x4xf32>
    %cst_71 = arith.constant 1.000000e+00 : f32
    %177 = vector.broadcast %cst_71 : f32 to vector<16x4xf32>
    %178 = arith.divf %176, %177 : vector<16x4xf32>
    %cst_72 = arith.constant 1.000000e+00 : f32
    %179 = vector.broadcast %cst_72 : f32 to vector<16x4xf32>
    %180 = arith.addf %179, %178 : vector<16x4xf32>
    %cst_73 = arith.constant 1.000000e+00 : f32
    %181 = vector.broadcast %cst_73 : f32 to vector<16x4xf32>
    %182 = arith.divf %181, %180 : vector<16x4xf32>
    %cst_74 = arith.constant dense<0.000000e+00> : vector<16xf32>
    %183 = vector.multi_reduction <add>, %182, %cst_74 [1] : vector<16x4xf32> to vector<16xf32>
    %184 = vector.shape_cast %183 : vector<16xf32> to vector<16x1xf32>
    %185 = vector.broadcast %184 : vector<16x1xf32> to vector<16x4xf32>
    %186 = arith.divf %182, %185 : vector<16x4xf32>
    %cst_75 = arith.constant 0.000000e+00 : f32
    %187 = vector.broadcast %cst_75 : f32 to vector<16x106xf32>
    %188 = tpu.concatenate %75, %186, %159, %160, %187 in 1 : vector<16x16xf32>, vector<16x4xf32>, vector<16x1xf32>, vector<16x1xf32>, vector<16x106xf32> -> vector<16x128xf32>
    %c0_76 = arith.constant 0 : index
    %c0_77 = arith.constant 0 : index
    %189 = vector.load %arg5[%c0_76, %c0_77] : memref<16x128xf32, #tpu.memory_space<vmem>>, vector<16x128xf32>
    tpu.vector_store %arg5[%c0_76, %c0_77], %188 {strides = array<i32>} : memref<16x128xf32, #tpu.memory_space<vmem>>, vector<16x128xf32>,
    return
  }
  func.func @transform_0(%arg0: i32) -> (i32, i32) {
    %c0_i32 = arith.constant 0 : i32
    %c0_i32_0 = arith.constant 0 : i32
    return %arg0, %c0_i32 : i32, i32
  }
  func.func @transform_1(%arg0: i32) -> (i32, i32) {
    %c0_i32 = arith.constant 0 : i32
    %c0_i32_0 = arith.constant 0 : i32
    %c0_i32_1 = arith.constant 0 : i32
    return %c0_i32, %c0_i32_0 : i32, i32
  }
  func.func @transform_2(%arg0: i32) -> (i32, i32) {
    %c0_i32 = arith.constant 0 : i32
    %c0_i32_0 = arith.constant 0 : i32
    %c0_i32_1 = arith.constant 0 : i32
    return %c0_i32, %c0_i32_0 : i32, i32
  }
  func.func @transform_3(%arg0: i32) -> (i32, i32) {
    %c0_i32 = arith.constant 0 : i32
    %c0_i32_0 = arith.constant 0 : i32
    %c0_i32_1 = arith.constant 0 : i32
    return %c0_i32, %c0_i32_0 : i32, i32
  }
  func.func @transform_4(%arg0: i32) -> (i32, i32) {
    %c0_i32 = arith.constant 0 : i32
    %c0_i32_0 = arith.constant 0 : i32
    return %arg0, %c0_i32 : i32, i32
  }
}

</mosaic_0001>

<llo_original>
// kernel: gdec_forward.1
$region0: #{gdec_forward.1}
  #allocation0 [shape = 'u32[]', space=smem, size = 0x4, offset = 0x4, fixed_abs, tag = 'smem constant byte address 0x4 - core index']
  #allocation1 [shape = 'u32[144,128]{1,0:T(1,128)}', space=vmem, size = 0x12000, scoped, tag = 'internal scratch']
  %s0 = inlined_call_operand.vmem [shape: f32[192,128], index: 0, kind: input, shape index: {}]
  %s1 = inlined_call_operand.vmem [shape: f32[192,128], index: 1, kind: input, shape index: {}]
  %s2 = inlined_call_operand.vmem [shape: f32[16,256], index: 2, kind: input, shape index: {}]
  %s3 = inlined_call_operand.vmem [shape: bf16[256,256], index: 3, kind: input, shape index: {}]
  %s4 = inlined_call_operand.vmem [shape: f32[64,128], index: 4, kind: output, shape index: {}]
  %s5 = sld [smem:[#allocation0]]
  $region49: #{gdec_forward.1} parent=0
    _
  %s7 = ssub.s32 1, %s5
  %s8 = scalar_select 0, %s7, %s5
  loop: start=0, step=1, limit=6
  $region2: #{gdec_forward.1} parent=0 // loop_pre_header
    _
  $region3: #{gdec_forward.1} parent=0 // loop_header
    %s10 = sphi 0, %s14
    %p11 = scmp.ge.s32.totalorder %s10, 6
    %s20 = sphi 0, %s22
    %s23 = sphi 0, %s20
    %s24 = sphi 0, %s23
    %s40 = sphi 0, %s24
    %s44 = sphi 0, %s44
    %s46 = sphi 0, %s44
    %s47 = sphi 0, %s46
    %s61 = sphi 0, %s47
    %s65 = sphi 0, %s65
    %s67 = sphi 0, %s65
    %s68 = sphi 0, %s67
    %s82 = sphi 0, %s68
    %s86 = sphi 0, %s86
    %s88 = sphi 0, %s86
    %s89 = sphi 0, %s88
    %s103 = sphi 0, %s89
    %s109 = sphi 0, %s111
    %s112 = sphi 0, %s109
    %s113 = sphi 0, %s112
    %s129 = sphi 0, %s113
  $region4: #{gdec_forward.1} parent=0 // loop_header_branch
    %13 = sbr.rel (%p11) target = $region8
  $region5: #{gdec_forward.1} parent=0 // loop_body
    %s15 = ssub.s32 %s10, 1
    %s16 = ssub.s32 %s10, 2
    %s17 = sadd.s32 %s10, 1
    %s18 = ssub.s32 %s10, %s17
    %p19 = scmp.eq.s32.totalorder %s18, 0
    %s21 = sadd.s32 %s20, 1
    %s22 = scalar_select %p19, %s20, %s21
    %p25 = pneg %p19
    %p26 = scmp.eq.s32.totalorder %s10, 3
    %p27 = por %p25, %p26
    %p28 = scmp.ne.s32.totalorder %s20, %s23
    %p29 = scmp.eq.s32.totalorder %s10, 0
    %p30 = por %p28, %p29
    %p31 = scmp.ne.s32.totalorder %s20, %s23
    %p32 = scmp.eq.s32.totalorder %s15, 3
    %p33 = por %p31, %p32
    %p34 = scmp.ne.s32.totalorder %s23, %s24
    %p35 = scmp.eq.s32.totalorder %s15, 0
    %p36 = por %p34, %p35
    %p37 = scmp.ne.s32.totalorder %s23, %s24
    %p38 = scmp.eq.s32.totalorder %s16, 3
    %p39 = por %p37, %p38
    %p41 = scmp.ne.s32.totalorder %s24, %s40
    %p42 = scmp.eq.s32.totalorder %s16, 0
    %p43 = por %p41, %p42
    %s45 = sadd.s32 %s44, 1
    %p48 = scmp.eq.s32.totalorder %s10, 3
    %p49 = scmp.ne.s32.totalorder %s44, %s46
    %p50 = scmp.eq.s32.totalorder %s10, 0
    %p51 = por %p49, %p50
    %p52 = scmp.ne.s32.totalorder %s44, %s46
    %p53 = scmp.eq.s32.totalorder %s15, 3
    %p54 = por %p52, %p53
    %p55 = scmp.ne.s32.totalorder %s46, %s47
    %p56 = scmp.eq.s32.totalorder %s15, 0
    %p57 = por %p55, %p56
    %p58 = scmp.ne.s32.totalorder %s46, %s47
    %p59 = scmp.eq.s32.totalorder %s16, 3
    %p60 = por %p58, %p59
    %p62 = scmp.ne.s32.totalorder %s47, %s61
    %p63 = scmp.eq.s32.totalorder %s16, 0
    %p64 = por %p62, %p63
    %s66 = sadd.s32 %s65, 1
    %p69 = scmp.eq.s32.totalorder %s10, 3
    %p70 = scmp.ne.s32.totalorder %s65, %s67
    %p71 = scmp.eq.s32.totalorder %s10, 0
    %p72 = por %p70, %p71
    %p73 = scmp.ne.s32.totalorder %s65, %s67
    %p74 = scmp.eq.s32.totalorder %s15, 3
    %p75 = por %p73, %p74
    %p76 = scmp.ne.s32.totalorder %s67, %s68
    %p77 = scmp.eq.s32.totalorder %s15, 0
    %p78 = por %p76, %p77
    %p79 = scmp.ne.s32.totalorder %s67, %s68
    %p80 = scmp.eq.s32.totalorder %s16, 3
    %p81 = por %p79, %p80
    %p83 = scmp.ne.s32.totalorder %s68, %s82
    %p84 = scmp.eq.s32.totalorder %s16, 0
    %p85 = por %p83, %p84
    %s87 = sadd.s32 %s86, 1
    %p90 = scmp.eq.s32.totalorder %s10, 3
    %p91 = scmp.ne.s32.totalorder %s86, %s88
    %p92 = scmp.eq.s32.totalorder %s10, 0
    %p93 = por %p91, %p92
    %p94 = scmp.ne.s32.totalorder %s86, %s88
    %p95 = scmp.eq.s32.totalorder %s15, 3
    %p96 = por %p94, %p95
    %p97 = scmp.ne.s32.totalorder %s88, %s89
    %p98 = scmp.eq.s32.totalorder %s15, 0
    %p99 = por %p97, %p98
    %p100 = scmp.ne.s32.totalorder %s88, %s89
    %p101 = scmp.eq.s32.totalorder %s16, 3
    %p102 = por %p100, %p101
    %p104 = scmp.ne.s32.totalorder %s89, %s103
    %p105 = scmp.eq.s32.totalorder %s16, 0
    %p106 = por %p104, %p105
    %s107 = ssub.s32 %s10, %s17
    %p108 = scmp.eq.s32.totalorder %s107, 0
    %s110 = sadd.s32 %s109, 1
    %s111 = scalar_select %p108, %s109, %s110
    %p114 = pneg %p108
    %p115 = scmp.eq.s32.totalorder %s10, 3
    %p116 = por %p114, %p115
    %p117 = scmp.ne.s32.totalorder %s109, %s112
    %p118 = scmp.eq.s32.totalorder %s10, 0
    %p119 = por %p117, %p118
    %p120 = scmp.ne.s32.totalorder %s109, %s112
    %p121 = scmp.eq.s32.totalorder %s15, 3
    %p122 = por %p120, %p121
    %p123 = scmp.ne.s32.totalorder %s112, %s113
    %p124 = scmp.eq.s32.totalorder %s15, 0
    %p125 = por %p123, %p124
    %p126 = scmp.ne.s32.totalorder %s112, %s113
    %p127 = scmp.eq.s32.totalorder %s16, 3
    %p128 = por %p126, %p127
    %p130 = scmp.ne.s32.totalorder %s113, %s129
    %p131 = scmp.eq.s32.totalorder %s16, 0
    %p132 = por %p130, %p131
    %p133 = scmp.le.s32.totalorder 1, %s10
    %p134 = scmp.lt.s32.totalorder %s10, 5
    %p135 = pnand %p133, %p134
    %p136 = pneg %p135
    // Predicated region
    $region9: #{gdec_forward.1} parent=5 // pred_check
      _
    $region10: #{gdec_forward.1} parent=5 // pred_check_branch
      %138 = sbr.rel (%p135) target = $region12
    $region11: #{gdec_forward.1} parent=5 // pred_region
      %s139 = ssub.s32 %s10, 1
      // Predicated region
      $region13: #{gdec_forward.1} parent=11 // pred_check
        %p140 = pneg %p57
      $region14: #{gdec_forward.1} parent=11 // pred_check_branch
        %142 = sbr.rel (%p140) target = $region16
      $region15: #{gdec_forward.1} parent=11 // pred_region
        _
      $region16: #{gdec_forward.1} parent=11 // pred_fallthru
        _
      // Predicated region
      $region17: #{gdec_forward.1} parent=11 // pred_check
        %p143 = pneg %p78
      $region18: #{gdec_forward.1} parent=11 // pred_check_branch
        %145 = sbr.rel (%p143) target = $region20
      $region19: #{gdec_forward.1} parent=11 // pred_region
        _
      $region20: #{gdec_forward.1} parent=11 // pred_fallthru
        _
      // Predicated region
      $region21: #{gdec_forward.1} parent=11 // pred_check
        %p146 = pneg %p99
      $region22: #{gdec_forward.1} parent=11 // pred_check_branch
        %148 = sbr.rel (%p146) target = $region24
      $region23: #{gdec_forward.1} parent=11 // pred_region
        _
      $region24: #{gdec_forward.1} parent=11 // pred_fallthru
        _
    $region12: #{gdec_forward.1} parent=5 // pred_fallthru
      _
    %p149 = scmp.lt.s32.totalorder %s10, 4
    // Predicated region
    $region25: #{gdec_forward.1} parent=5 // pred_check
      %p150 = pneg %p149
    $region26: #{gdec_forward.1} parent=5 // pred_check_branch
      %152 = sbr.rel (%p150) target = $region28
    $region27: #{gdec_forward.1} parent=5 // pred_region
      // Predicated region
      $region29: #{gdec_forward.1} parent=27 // pred_check
        %p153 = pneg %p30
      $region30: #{gdec_forward.1} parent=27 // pred_check_branch
        %155 = sbr.rel (%p153) target = $region32
      $region31: #{gdec_forward.1} parent=27 // pred_region
        %s156 = smul.u32 6, %s10
        %p157 = scmp.lt.s32.totalorder %s156, 23
        %s158 = scalar_select %p157, %s156, 23
        %s159 = smul.addr %s158, 8
        %s160 = scalar_lea.vmem %s0, %s159
        %s161 = smul.u32 6, %s10
      $region32: #{gdec_forward.1} parent=27 // pred_fallthru
        _
    $region28: #{gdec_forward.1} parent=5 // pred_fallthru
      _
    %p162 = scmp.le.s32.totalorder 1, %s10
    %p163 = scmp.lt.s32.totalorder %s10, 5
    %p164 = pnand %p162, %p163
    %p165 = pneg %p164
    // Predicated region
    $region33: #{gdec_forward.1} parent=5 // pred_check
      _
    $region34: #{gdec_forward.1} parent=5 // pred_check_branch
      %167 = sbr.rel (%p164) target = $region36
    $region35: #{gdec_forward.1} parent=5 // pred_region
      %s168 = ssub.s32 %s10, 1
      %s169 = smul.u32 6, %s15
      %p170 = scmp.lt.s32.totalorder %s169, 23
      %s171 = scalar_select %p170, %s169, 23
      %s172 = smul.addr %s171, 8
      %s173 = scalar_lea.vmem %s0, %s172
      %p174 = pneg %p36
      %p175 = pneg %p33
      %p176 = pneg %p57
      %p177 = pneg %p54
      %p178 = pneg %p78
      %p179 = pneg %p75
      %p180 = pneg %p99
      %p181 = pneg %p96
      %p182 = pneg %p125
      %p183 = pneg %p122
      %s184 = smul.u32 2, %s15
      %p185 = scmp.lt.s32.totalorder %s184, 7
      %s186 = scalar_select %p185, %s184, 7
      %s187 = smul.addr %s186, 8
      %s188 = scalar_lea.vmem %s4, %s187
      %s189 = smul.u32 6, %s15
      %p190 = scmp.lt.s32.totalorder %s189, 23
      %s191 = scalar_select %p190, %s189, 23
      %s192 = smul.addr %s191, 8
      %s193 = scalar_lea.vmem %s0, %s192
      %s194 = smul.u32 6, %s15
      %s195 = smul.u32 2, %s15
      %p196 = scmp.lt.s32.totalorder %s195, 7
      %s197 = scalar_select %p196, %s195, 7
      %s198 = smul.addr %s197, 8
      %s199 = scalar_lea.vmem %s4, %s198
      %s200 = smul.u32 2, %s15
      %v201 = vld [vmem:[%s2 + $0x3] ss:$0 sm:$0xff]
      %v202 = vld [vmem:[%s2 + $0x4] ss:$0 sm:$0xff]
      %v203 = vld [vmem:[%s193] sm:$0xff]
      %v204 = vld [vmem:[%s193 + $0x8] sm:$0xff]
      %v205 = vld [vmem:[%s193 + $0x10] sm:$0xff]
      %v206 = vld [vmem:[%s193 + $0x18] sm:$0xff]
      %v207 = vmul.f32 %v205, 0.1
      %v208 = vmul.f32 %v206, 0.1
      %v209 = vadd.f32 %v203, %v207
      %v210 = vadd.f32 %v204, %v208
      %v211 = vld [vmem:[%s1] sm:$0xff]
      %v212 = vld [vmem:[%s1 + $0x8] sm:$0xff]
      %vm213 = vcmask 130048
      %v215 = vsel %vm213, %v209, 0
      %v218 = vsel %vm213, %v210, 0
      %220 = vmatprep.subr.mxu0 0.0
      %221 = vmatpush1.msra.mxu0 %v211
      %222 = vmatprep.subr.mxu0 0.0
      %223 = vmatpush1.msra.mxu0 %v212
      %224 = vmatprep.subr.mxu0 0.0
      %225 = vmatpush1.msra.mxu0 0.0
      %226 = vmatprep.subr.mxu0 0.0
      %227 = vmatpush1.msra.mxu0 0.0
      %228 = vmatprep.subr.mxu0 0.0
      %229 = vmatpush1.msra.mxu0 0.0
      %230 = vmatprep.subr.mxu0 0.0
      %231 = vmatpush1.msra.mxu0 0.0
      %232 = vmatprep.subr.mxu0 0.0
      %233 = vmatpush1.msra.mxu0 0.0
      %234 = vmatprep.subr.mxu0 0.0
      %235 = vmatpush1.msra.mxu0 0.0
      %236 = vmatprep.subr.mxu0 0.0
      %237 = vmatpush1.msra.mxu0 0.0
      %238 = vmatprep.subr.mxu0 0.0
      %239 = vmatpush1.msra.mxu0 0.0
      %240 = vmatprep.subr.mxu0 0.0
      %241 = vmatpush1.msra.mxu0 0.0
      %242 = vmatprep.subr.mxu0 0.0
      %243 = vmatpush1.msra.mxu0 0.0
      %244 = vmatprep.subr.mxu0 0.0
      %245 = vmatpush1.msra.mxu0 0.0
      %246 = vmatprep.subr.mxu0 0.0
      %247 = vmatpush1.msra.mxu0 0.0
      %248 = vmatprep.subr.mxu0 0.0
      %249 = vmatpush1.msra.mxu0 0.0
      %250 = vmatprep.subr.mxu0 0.0
      %251 = vmatpush1.msra.mxu0 0.0
      %252 = vmatprep.subr.mxu0 0.0
      %253 = vmatpush1.msra.mxu0 0.0
      %254 = vmatprep.subr.mxu0 0.0
      %255 = vmatpush1.msra.mxu0 0.0
      %256 = vmatprep.subr.mxu0 0.0
      %257 = vmatpush1.msra.mxu0 0.0
      %258 = vmatprep.subr.mxu0 0.0
      %259 = vmatpush1.msra.mxu0 0.0
      %260 = vmatprep.subr.mxu0 0.0
      %261 = vmatpush1.msra.mxu0 0.0
      %262 = vmatprep.subr.mxu0 0.0
      %263 = vmatpush1.msra.mxu0 0.0
      %264 = vmatprep.subr.mxu0 0.0
      %265 = vmatpush1.msra.mxu0 0.0
      %266 = vmatprep.subr.mxu0 0.0
      %267 = vmatpush1.msra.mxu0 0.0
      %268 = vmatprep.subr.mxu0 0.0
      %269 = vmatpush1.msra.mxu0 0.0
      %270 = vmatprep.subr.mxu0 0.0
      %271 = vmatpush1.msra.mxu0 0.0
      %272 = vmatprep.subr.mxu0 0.0
      %273 = vmatpush1.msra.mxu0 0.0
      %274 = vmatprep.subr.mxu0 0.0
      %275 = vmatpush1.msra.mxu0 0.0
      %276 = vmatprep.subr.mxu0 0.0
      %277 = vmatpush1.msra.mxu0 0.0
      %278 = vmatprep.subr.mxu0 0.0
      %279 = vmatpush1.msra.mxu0 0.0
      %280 = vmatprep.subr.mxu0 0.0
      %281 = vmatpush1.msra.mxu0 0.0
      %282 = vmatprep.subr.mxu0 0.0
      %283 = vmatpush1.msra.mxu0 0.0
      %284 = vmatprep.mubr.f32.mxu0 0.0
      %285 = vmatmul.mubr.f32.gmra.mrb[0].mxu0 %v215
      %v286 = vpop.f32.mrb[0].mxu0
      %v287 = vadd.f32 %v201, %v286
      %v288 = vpop.f32.mrb[0].mxu0
      %289 = vmatprep.mubr.f32.mxu0 0.0
      %290 = vmatmul.mubr.f32.gmra.mrb[0].mxu0 %v218
      %v291 = vpop.f32.mrb[0].mxu0
      %v292 = vadd.f32 %v201, %v291
      %v293 = vpop.f32.mrb[0].mxu0
      %294 = vdwg.mxu0
      %vm295 = vcmp.gt.f32.partialorder %v287, 0.0
      %vm296 = vcmp.gt.f32.partialorder %v292, 0.0
      %v297 = vmul.f32 %v287, 0.01
      %v298 = vmul.f32 %v292, 0.01
      %v299 = vsel %vm295, %v287, %v297
      %v300 = vsel %vm296, %v292, %v298
      %v301 = vld [vmem:[%s1 + $0x10] sm:$0xff]
      %v302 = vld [vmem:[%s1 + $0x18] sm:$0xff]
      %v303 = vld [vmem:[%s1 + $0x20] sm:$0x1]
      %v304 = vlaneseq
      %v305 = vshrl.u32 %v304, 7
      %v306 = vsub.s32 0, %v305
      %v307 = vrot.slane %v303, %v306
      %v309 = vsel %vm213, %v299, 0
      %v312 = vsel %vm213, %v300, 0
      %314 = vmatprep.subr.mxu0 0.0
      %315 = vmatpush1.msra.mxu0 %v301
      %316 = vmatprep.subr.mxu0 0.0
      %317 = vmatpush1.msra.mxu0 %v302
      %318 = vmatprep.subr.mxu0 0.0
      %319 = vmatpush1.msra.mxu0 0.0
      %320 = vmatprep.subr.mxu0 0.0
      %321 = vmatpush1.msra.mxu0 0.0
      %322 = vmatprep.subr.mxu0 0.0
      %323 = vmatpush1.msra.mxu0 0.0
      %324 = vmatprep.subr.mxu0 0.0
      %325 = vmatpush1.msra.mxu0 0.0
      %326 = vmatprep.subr.mxu0 0.0
      %327 = vmatpush1.msra.mxu0 0.0
      %328 = vmatprep.subr.mxu0 0.0
      %329 = vmatpush1.msra.mxu0 0.0
      %330 = vmatprep.subr.mxu0 0.0
      %331 = vmatpush1.msra.mxu0 0.0
      %332 = vmatprep.subr.mxu0 0.0
      %333 = vmatpush1.msra.mxu0 0.0
      %334 = vmatprep.subr.mxu0 0.0
      %335 = vmatpush1.msra.mxu0 0.0
      %336 = vmatprep.subr.mxu0 0.0
      %337 = vmatpush1.msra.mxu0 0.0
      %338 = vmatprep.subr.mxu0 0.0
      %339 = vmatpush1.msra.mxu0 0.0
      %340 = vmatprep.subr.mxu0 0.0
      %341 = vmatpush1.msra.mxu0 0.0
      %342 = vmatprep.subr.mxu0 0.0
      %343 = vmatpush1.msra.mxu0 0.0
      %344 = vmatprep.subr.mxu0 0.0
      %345 = vmatpush1.msra.mxu0 0.0
      %346 = vmatprep.subr.mxu0 0.0
      %347 = vmatpush1.msra.mxu0 0.0
      %348 = vmatprep.subr.mxu0 0.0
      %349 = vmatpush1.msra.mxu0 0.0
      %350 = vmatprep.subr.mxu0 0.0
      %351 = vmatpush1.msra.mxu0 0.0
      %352 = vmatprep.subr.mxu0 0.0
      %353 = vmatpush1.msra.mxu0 0.0
      %354 = vmatprep.subr.mxu0 0.0
      %355 = vmatpush1.msra.mxu0 0.0
      %356 = vmatprep.subr.mxu0 0.0
      %357 = vmatpush1.msra.mxu0 0.0
      %358 = vmatprep.subr.mxu0 0.0
      %359 = vmatpush1.msra.mxu0 0.0
      %360 = vmatprep.subr.mxu0 0.0
      %361 = vmatpush1.msra.mxu0 0.0
      %362 = vmatprep.subr.mxu0 0.0
      %363 = vmatpush1.msra.mxu0 0.0
      %364 = vmatprep.subr.mxu0 0.0
      %365 = vmatpush1.msra.mxu0 0.0
      %366 = vmatprep.subr.mxu0 0.0
      %367 = vmatpush1.msra.mxu0 0.0
      %368 = vmatprep.subr.mxu0 0.0
      %369 = vmatpush1.msra.mxu0 0.0
      %370 = vmatprep.subr.mxu0 0.0
      %371 = vmatpush1.msra.mxu0 0.0
      %372 = vmatprep.subr.mxu0 0.0
      %373 = vmatpush1.msra.mxu0 0.0
      %374 = vmatprep.subr.mxu0 0.0
      %375 = vmatpush1.msra.mxu0 0.0
      %376 = vmatprep.subr.mxu0 0.0
      %377 = vmatpush1.msra.mxu0 0.0
      %378 = vmatprep.mubr.f32.mxu0 0.0
      %379 = vmatmul.mubr.f32.gmra.mrb[0].mxu0 %v309
      %v380 = vpop.f32.mrb[0].mxu0
      %v381 = vadd.f32 %v307, %v380
      %v382 = vpop.f32.mrb[0].mxu0
      %383 = vmatprep.mubr.f32.mxu0 0.0
      %384 = vmatmul.mubr.f32.gmra.mrb[0].mxu0 %v312
      %v385 = vpop.f32.mrb[0].mxu0
      %v386 = vadd.f32 %v307, %v385
      %v387 = vpop.f32.mrb[0].mxu0
      %388 = vdwg.mxu0
      %vm389 = vcmp.gt.f32.partialorder %v381, 0.0
      %vm390 = vcmp.gt.f32.partialorder %v386, 0.0
      %v391 = vmul.f32 %v381, 0.01
      %v392 = vmul.f32 %v386, 0.01
      %v393 = vsel %vm389, %v381, %v391
      %v394 = vsel %vm390, %v386, %v392
      %v395 = vld [vmem:[%s1 + $0x28] sm:$0xff]
      %v396 = vld [vmem:[%s1 + $0x30] sm:$0xff]
      %v397 = vld [vmem:[%s1 + $0x38] sm:$0xff]
      %v398 = vld [vmem:[%s1 + $0x40] sm:$0xff]
      %v399 = vld [vmem:[%s1 + $0x48] sm:$0x1]
      %v400 = vlaneseq
      %v401 = vshrl.u32 %v400, 7
      %v402 = vsub.s32 0, %v401
      %v403 = vrot.slane %v399, %v402
      %vm404 = vcmask 261120
      %v406 = vsel %vm404, %v393, 0
      %v409 = vsel %vm404, %v394, 0
      %411 = vmatprep.subr.mxu0 0.0
      %412 = vmatpush1.msra.mxu0 %v395
      %413 = vmatprep.subr.mxu0 0.0
      %414 = vmatpush1.msra.mxu0 %v396
      %415 = vmatprep.subr.mxu0 0.0
      %416 = vmatpush1.msra.mxu0 %v397
      %417 = vmatprep.subr.mxu0 0.0
      %418 = vmatpush1.msra.mxu0 %v398
      %419 = vmatprep.subr.mxu0 0.0
      %420 = vmatpush1.msra.mxu0 0.0
      %421 = vmatprep.subr.mxu0 0.0
      %422 = vmatpush1.msra.mxu0 0.0
      %423 = vmatprep.subr.mxu0 0.0
      %424 = vmatpush1.msra.mxu0 0.0
      %425 = vmatprep.subr.mxu0 0.0
      %426 = vmatpush1.msra.mxu0 0.0
      %427 = vmatprep.subr.mxu0 0.0
      %428 = vmatpush1.msra.mxu0 0.0
      %429 = vmatprep.subr.mxu0 0.0
      %430 = vmatpush1.msra.mxu0 0.0
      %431 = vmatprep.subr.mxu0 0.0
      %432 = vmatpush1.msra.mxu0 0.0
      %433 = vmatprep.subr.mxu0 0.0
      %434 = vmatpush1.msra.mxu0 0.0
      %435 = vmatprep.subr.mxu0 0.0
      %436 = vmatpush1.msra.mxu0 0.0
      %437 = vmatprep.subr.mxu0 0.0
      %438 = vmatpush1.msra.mxu0 0.0
      %439 = vmatprep.subr.mxu0 0.0
      %440 = vmatpush1.msra.mxu0 0.0
      %441 = vmatprep.subr.mxu0 0.0
      %442 = vmatpush1.msra.mxu0 0.0
      %443 = vmatprep.subr.mxu0 0.0
      %444 = vmatpush1.msra.mxu0 0.0
      %445 = vmatprep.subr.mxu0 0.0
      %446 = vmatpush1.msra.mxu0 0.0
      %447 = vmatprep.subr.mxu0 0.0
      %448 = vmatpush1.msra.mxu0 0.0
      %449 = vmatprep.subr.mxu0 0.0
      %450 = vmatpush1.msra.mxu0 0.0
      %451 = vmatprep.subr.mxu0 0.0
      %452 = vmatpush1.msra.mxu0 0.0
      %453 = vmatprep.subr.mxu0 0.0
      %454 = vmatpush1.msra.mxu0 0.0
      %455 = vmatprep.subr.mxu0 0.0
      %456 = vmatpush1.msra.mxu0 0.0
      %457 = vmatprep.subr.mxu0 0.0
      %458 = vmatpush1.msra.mxu0 0.0
      %459 = vmatprep.subr.mxu0 0.0
      %460 = vmatpush1.msra.mxu0 0.0
      %461 = vmatprep.subr.mxu0 0.0
      %462 = vmatpush1.msra.mxu0 0.0
      %463 = vmatprep.subr.mxu0 0.0
      %464 = vmatpush1.msra.mxu0 0.0
      %465 = vmatprep.subr.mxu0 0.0
      %466 = vmatpush1.msra.mxu0 0.0
      %467 = vmatprep.subr.mxu0 0.0
      %468 = vmatpush1.msra.mxu0 0.0
      %469 = vmatprep.subr.mxu0 0.0
      %470 = vmatpush1.msra.mxu0 0.0
      %471 = vmatprep.subr.mxu0 0.0
      %472 = vmatpush1.msra.mxu0 0.0
      %473 = vmatprep.subr.mxu0 0.0
      %474 = vmatpush1.msra.mxu0 0.0
      %475 = vmatprep.mubr.f32.mxu0 0.0
      %476 = vmatmul.mubr.f32.gmra.mrb[0].mxu0 %v406
      %v477 = vpop.f32.mrb[0].mxu0
      %v478 = vadd.f32 %v403, %v477
      %v479 = vpop.f32.mrb[0].mxu0
      %480 = vmatprep.mubr.f32.mxu0 0.0
      %481 = vmatmul.mubr.f32.gmra.mrb[0].mxu0 %v409
      %v482 = vpop.f32.mrb[0].mxu0
      %v483 = vadd.f32 %v403, %v482
      %v484 = vpop.f32.mrb[0].mxu0
      %485 = vdwg.mxu0
      %vm486 = vcmp.gt.f32.partialorder %v478, 0.0
      %vm487 = vcmp.gt.f32.partialorder %v483, 0.0
      %v488 = vmul.f32 %v478, 0.01
      %v489 = vmul.f32 %v483, 0.01
      %v490 = vsel %vm486, %v478, %v488
      %v491 = vsel %vm487, %v483, %v489
      %v492 = vld [vmem:[%s1 + $0x50] sm:$0xff]
      %v493 = vld [vmem:[%s1 + $0x58] sm:$0xff]
      %v494 = vld [vmem:[%s1 + $0x60] sm:$0x1]
      %v495 = vlaneseq
      %v496 = vshrl.u32 %v495, 7
      %v497 = vsub.s32 0, %v496
      %v498 = vrot.slane %v494, %v497
      %v500 = vsel %vm213, %v490, 0
      %v503 = vsel %vm213, %v491, 0
      %505 = vmatprep.subr.mxu0 0.0
      %506 = vmatpush1.msra.mxu0 %v492
      %507 = vmatprep.subr.mxu0 0.0
      %508 = vmatpush1.msra.mxu0 %v493
      %509 = vmatprep.subr.mxu0 0.0
      %510 = vmatpush1.msra.mxu0 0.0
      %511 = vmatprep.subr.mxu0 0.0
      %512 = vmatpush1.msra.mxu0 0.0
      %513 = vmatprep.subr.mxu0 0.0
      %514 = vmatpush1.msra.mxu0 0.0
      %515 = vmatprep.subr.mxu0 0.0
      %516 = vmatpush1.msra.mxu0 0.0
      %517 = vmatprep.subr.mxu0 0.0
      %518 = vmatpush1.msra.mxu0 0.0
      %519 = vmatprep.subr.mxu0 0.0
      %520 = vmatpush1.msra.mxu0 0.0
      %521 = vmatprep.subr.mxu0 0.0
      %522 = vmatpush1.msra.mxu0 0.0
      %523 = vmatprep.subr.mxu0 0.0
      %524 = vmatpush1.msra.mxu0 0.0
      %525 = vmatprep.subr.mxu0 0.0
      %526 = vmatpush1.msra.mxu0 0.0
      %527 = vmatprep.subr.mxu0 0.0
      %528 = vmatpush1.msra.mxu0 0.0
      %529 = vmatprep.subr.mxu0 0.0
      %530 = vmatpush1.msra.mxu0 0.0
      %531 = vmatprep.subr.mxu0 0.0
      %532 = vmatpush1.msra.mxu0 0.0
      %533 = vmatprep.subr.mxu0 0.0
      %534 = vmatpush1.msra.mxu0 0.0
      %535 = vmatprep.subr.mxu0 0.0
      %536 = vmatpush1.msra.mxu0 0.0
      %537 = vmatprep.subr.mxu0 0.0
      %538 = vmatpush1.msra.mxu0 0.0
      %539 = vmatprep.subr.mxu0 0.0
      %540 = vmatpush1.msra.mxu0 0.0
      %541 = vmatprep.subr.mxu0 0.0
      %542 = vmatpush1.msra.mxu0 0.0
      %543 = vmatprep.subr.mxu0 0.0
      %544 = vmatpush1.msra.mxu0 0.0
      %545 = vmatprep.subr.mxu0 0.0
      %546 = vmatpush1.msra.mxu0 0.0
      %547 = vmatprep.subr.mxu0 0.0
      %548 = vmatpush1.msra.mxu0 0.0
      %549 = vmatprep.subr.mxu0 0.0
      %550 = vmatpush1.msra.mxu0 0.0
      %551 = vmatprep.subr.mxu0 0.0
      %552 = vmatpush1.msra.mxu0 0.0
      %553 = vmatprep.subr.mxu0 0.0
      %554 = vmatpush1.msra.mxu0 0.0
      %555 = vmatprep.subr.mxu0 0.0
      %556 = vmatpush1.msra.mxu0 0.0
      %557 = vmatprep.subr.mxu0 0.0
      %558 = vmatpush1.msra.mxu0 0.0
      %559 = vmatprep.subr.mxu0 0.0
      %560 = vmatpush1.msra.mxu0 0.0
      %561 = vmatprep.subr.mxu0 0.0
      %562 = vmatpush1.msra.mxu0 0.0
      %563 = vmatprep.subr.mxu0 0.0
      %564 = vmatpush1.msra.mxu0 0.0
      %565 = vmatprep.subr.mxu0 0.0
      %566 = vmatpush1.msra.mxu0 0.0
      %567 = vmatprep.subr.mxu0 0.0
      %568 = vmatpush1.msra.mxu0 0.0
      %569 = vmatprep.mubr.f32.mxu0 0.0
      %570 = vmatmul.mubr.f32.gmra.mrb[0].mxu0 %v500
      %v571 = vpop.f32.mrb[0].mxu0
      %v572 = vadd.f32 %v498, %v571
      %v573 = vpop.f32.mrb[0].mxu0
      %574 = vmatprep.mubr.f32.mxu0 0.0
      %575 = vmatmul.mubr.f32.gmra.mrb[0].mxu0 %v503
      %v576 = vpop.f32.mrb[0].mxu0
      %v577 = vadd.f32 %v498, %v576
      %v578 = vpop.f32.mrb[0].mxu0
      %579 = vdwg.mxu0
      %vm580 = vcmp.gt.f32.partialorder %v572, 0.0
      %vm581 = vcmp.gt.f32.partialorder %v577, 0.0
      %v582 = vmul.f32 %v572, 0.01
      %v583 = vmul.f32 %v577, 0.01
      %v584 = vsel %vm580, %v572, %v582
      %v585 = vsel %vm581, %v577, %v583
      %v586 = vld [vmem:[%s1 + $0x68] sm:$0xff]
      %v587 = vld [vmem:[%s1 + $0x70] sm:$0x1]
      %v588 = vlaneseq
      %v589 = vshrl.u32 %v588, 7
      %v590 = vsub.s32 0, %v589
      %v591 = vrot.slane %v587, %v590
      %vm592 = vcmask 64512
      %v594 = vsel %vm592, %v584, 0
      %v597 = vsel %vm592, %v585, 0
      %599 = vmatprep.subr.mxu0 0.0
      %600 = vmatpush1.msra.mxu0 %v586
      %601 = vmatprep.subr.mxu0 0.0
      %602 = vmatpush1.msra.mxu0 0.0
      %603 = vmatprep.subr.mxu0 0.0
      %604 = vmatpush1.msra.mxu0 0.0
      %605 = vmatprep.subr.mxu0 0.0
      %606 = vmatpush1.msra.mxu0 0.0
      %607 = vmatprep.subr.mxu0 0.0
      %608 = vmatpush1.msra.mxu0 0.0
      %609 = vmatprep.subr.mxu0 0.0
      %610 = vmatpush1.msra.mxu0 0.0
      %611 = vmatprep.subr.mxu0 0.0
      %612 = vmatpush1.msra.mxu0 0.0
      %613 = vmatprep.subr.mxu0 0.0
      %614 = vmatpush1.msra.mxu0 0.0
      %615 = vmatprep.subr.mxu0 0.0
      %616 = vmatpush1.msra.mxu0 0.0
      %617 = vmatprep.subr.mxu0 0.0
      %618 = vmatpush1.msra.mxu0 0.0
      %619 = vmatprep.subr.mxu0 0.0
      %620 = vmatpush1.msra.mxu0 0.0
      %621 = vmatprep.subr.mxu0 0.0
      %622 = vmatpush1.msra.mxu0 0.0
      %623 = vmatprep.subr.mxu0 0.0
      %624 = vmatpush1.msra.mxu0 0.0
      %625 = vmatprep.subr.mxu0 0.0
      %626 = vmatpush1.msra.mxu0 0.0
      %627 = vmatprep.subr.mxu0 0.0
      %628 = vmatpush1.msra.mxu0 0.0
      %629 = vmatprep.subr.mxu0 0.0
      %630 = vmatpush1.msra.mxu0 0.0
      %631 = vmatprep.subr.mxu0 0.0
      %632 = vmatpush1.msra.mxu0 0.0
      %633 = vmatprep.subr.mxu0 0.0
      %634 = vmatpush1.msra.mxu0 0.0
      %635 = vmatprep.subr.mxu0 0.0
      %636 = vmatpush1.msra.mxu0 0.0
      %637 = vmatprep.subr.mxu0 0.0
      %638 = vmatpush1.msra.mxu0 0.0
      %639 = vmatprep.subr.mxu0 0.0
      %640 = vmatpush1.msra.mxu0 0.0
      %641 = vmatprep.subr.mxu0 0.0
      %642 = vmatpush1.msra.mxu0 0.0
      %643 = vmatprep.subr.mxu0 0.0
      %644 = vmatpush1.msra.mxu0 0.0
      %645 = vmatprep.subr.mxu0 0.0
      %646 = vmatpush1.msra.mxu0 0.0
      %647 = vmatprep.subr.mxu0 0.0
      %648 = vmatpush1.msra.mxu0 0.0
      %649 = vmatprep.subr.mxu0 0.0
      %650 = vmatpush1.msra.mxu0 0.0
      %651 = vmatprep.subr.mxu0 0.0
      %652 = vmatpush1.msra.mxu0 0.0
      %653 = vmatprep.subr.mxu0 0.0
      %654 = vmatpush1.msra.mxu0 0.0
      %655 = vmatprep.subr.mxu0 0.0
      %656 = vmatpush1.msra.mxu0 0.0
      %657 = vmatprep.subr.mxu0 0.0
      %658 = vmatpush1.msra.mxu0 0.0
      %659 = vmatprep.subr.mxu0 0.0
      %660 = vmatpush1.msra.mxu0 0.0
      %661 = vmatprep.subr.mxu0 0.0
      %662 = vmatpush1.msra.mxu0 0.0
      %663 = vmatprep.mubr.f32.mxu0 0.0
      %664 = vmatmul.mubr.f32.gmra.mrb[0].mxu0 %v594
      %v665 = vpop.f32.mrb[0].mxu0
      %v666 = vadd.f32 %v591, %v665
      %v667 = vpop.f32.mrb[0].mxu0
      %668 = vmatprep.mubr.f32.mxu0 0.0
      %669 = vmatmul.mubr.f32.gmra.mrb[0].mxu0 %v597
      %v670 = vpop.f32.mrb[0].mxu0
      %v671 = vadd.f32 %v591, %v670
      %v672 = vpop.f32.mrb[0].mxu0
      %673 = vdwg.mxu0
      %vm674 = vcmp.gt.f32.partialorder %v666, 0.0
      %vm675 = vcmp.gt.f32.partialorder %v671, 0.0
      %v676 = vmul.f32 %v666, 0.01
      %v677 = vmul.f32 %v671, 0.01
      %v678 = vsel %vm674, %v666, %v676
      %v679 = vsel %vm675, %v671, %v677
      %v680 = vld [vmem:[%s1 + $0x78] sm:$0xff]
      %v681 = vld [vmem:[%s1 + $0x80] sm:$0xff]
      %v682 = vld [vmem:[%s1 + $0x88] sm:$0x1]
      %v683 = vlaneseq
      %v684 = vshrl.u32 %v683, 7
      %v685 = vsub.s32 0, %v684
      %v686 = vrot.slane %v682, %v685
      %v688 = vsel %vm213, %v678, 0
      %v691 = vsel %vm213, %v679, 0
      %693 = vmatprep.subr.mxu0 0.0
      %694 = vmatpush1.msra.mxu0 %v680
      %695 = vmatprep.subr.mxu0 0.0
      %696 = vmatpush1.msra.mxu0 %v681
      %697 = vmatprep.subr.mxu0 0.0
      %698 = vmatpush1.msra.mxu0 0.0
      %699 = vmatprep.subr.mxu0 0.0
      %700 = vmatpush1.msra.mxu0 0.0
      %701 = vmatprep.subr.mxu0 0.0
      %702 = vmatpush1.msra.mxu0 0.0
      %703 = vmatprep.subr.mxu0 0.0
      %704 = vmatpush1.msra.mxu0 0.0
      %705 = vmatprep.subr.mxu0 0.0
      %706 = vmatpush1.msra.mxu0 0.0
      %707 = vmatprep.subr.mxu0 0.0
      %708 = vmatpush1.msra.mxu0 0.0
      %709 = vmatprep.subr.mxu0 0.0
      %710 = vmatpush1.msra.mxu0 0.0
      %711 = vmatprep.subr.mxu0 0.0
      %712 = vmatpush1.msra.mxu0 0.0
      %713 = vmatprep.subr.mxu0 0.0
      %714 = vmatpush1.msra.mxu0 0.0
      %715 = vmatprep.subr.mxu0 0.0
      %716 = vmatpush1.msra.mxu0 0.0
      %717 = vmatprep.subr.mxu0 0.0
      %718 = vmatpush1.msra.mxu0 0.0
      %719 = vmatprep.subr.mxu0 0.0
      %720 = vmatpush1.msra.mxu0 0.0
      %721 = vmatprep.subr.mxu0 0.0
      %722 = vmatpush1.msra.mxu0 0.0
      %723 = vmatprep.subr.mxu0 0.0
      %724 = vmatpush1.msra.mxu0 0.0
      %725 = vmatprep.subr.mxu0 0.0
      %726 = vmatpush1.msra.mxu0 0.0
      %727 = vmatprep.subr.mxu0 0.0
      %728 = vmatpush1.msra.mxu0 0.0
      %729 = vmatprep.subr.mxu0 0.0
      %730 = vmatpush1.msra.mxu0 0.0
      %731 = vmatprep.subr.mxu0 0.0
      %732 = vmatpush1.msra.mxu0 0.0
      %733 = vmatprep.subr.mxu0 0.0
      %734 = vmatpush1.msra.mxu0 0.0
      %735 = vmatprep.subr.mxu0 0.0
      %736 = vmatpush1.msra.mxu0 0.0
      %737 = vmatprep.subr.mxu0 0.0
      %738 = vmatpush1.msra.mxu0 0.0
      %739 = vmatprep.subr.mxu0 0.0
      %740 = vmatpush1.msra.mxu0 0.0
      %741 = vmatprep.subr.mxu0 0.0
      %742 = vmatpush1.msra.mxu0 0.0
      %743 = vmatprep.subr.mxu0 0.0
      %744 = vmatpush1.msra.mxu0 0.0
      %745 = vmatprep.subr.mxu0 0.0
      %746 = vmatpush1.msra.mxu0 0.0
      %747 = vmatprep.subr.mxu0 0.0
      %748 = vmatpush1.msra.mxu0 0.0
      %749 = vmatprep.subr.mxu0 0.0
      %750 = vmatpush1.msra.mxu0 0.0
      %751 = vmatprep.subr.mxu0 0.0
      %752 = vmatpush1.msra.mxu0 0.0
      %753 = vmatprep.subr.mxu0 0.0
      %754 = vmatpush1.msra.mxu0 0.0
      %755 = vmatprep.subr.mxu0 0.0
      %756 = vmatpush1.msra.mxu0 0.0
      %757 = vmatprep.mubr.f32.mxu0 0.0
      %758 = vmatmul.mubr.f32.gmra.mrb[0].mxu0 %v688
      %v759 = vpop.f32.mrb[0].mxu0
      %v760 = vadd.f32 %v686, %v759
      %v761 = vpop.f32.mrb[0].mxu0
      %762 = vmatprep.mubr.f32.mxu0 0.0
      %763 = vmatmul.mubr.f32.gmra.mrb[0].mxu0 %v691
      %v764 = vpop.f32.mrb[0].mxu0
      %v765 = vadd.f32 %v686, %v764
      %v766 = vpop.f32.mrb[0].mxu0
      %767 = vdwg.mxu0
      %vm768 = vcmp.gt.f32.partialorder %v760, 0.0
      %vm769 = vcmp.gt.f32.partialorder %v765, 0.0
      %v770 = vmul.f32 %v760, 0.01
      %v771 = vmul.f32 %v765, 0.01
      %v772 = vsel %vm768, %v760, %v770
      %v773 = vsel %vm769, %v765, %v771
      %v774 = vld [vmem:[%s1 + $0x90] sm:$0xff]
      %v775 = vld [vmem:[%s1 + $0x98] sm:$0xff]
      %v776 = vld [vmem:[%s1 + $0xa0] sm:$0xff]
      %v777 = vld [vmem:[%s1 + $0xa8] sm:$0xff]
      %v778 = vld [vmem:[%s1 + $0xb0] sm:$0x1]
      %v779 = vlaneseq
      %v780 = vshrl.u32 %v779, 7
      %v781 = vsub.s32 0, %v780
      %v782 = vrot.slane %v778, %v781
      %v784 = vsel %vm404, %v772, 0
      %v787 = vsel %vm404, %v773, 0
      %789 = vmatprep.subr.mxu0 0.0
      %790 = vmatpush1.msra.mxu0 %v774
      %791 = vmatprep.subr.mxu0 0.0
      %792 = vmatpush1.msra.mxu0 %v775
      %793 = vmatprep.subr.mxu0 0.0
      %794 = vmatpush1.msra.mxu0 %v776
      %795 = vmatprep.subr.mxu0 0.0
      %796 = vmatpush1.msra.mxu0 %v777
      %797 = vmatprep.subr.mxu0 0.0
      %798 = vmatpush1.msra.mxu0 0.0
      %799 = vmatprep.subr.mxu0 0.0
      %800 = vmatpush1.msra.mxu0 0.0
      %801 = vmatprep.subr.mxu0 0.0
      %802 = vmatpush1.msra.mxu0 0.0
      %803 = vmatprep.subr.mxu0 0.0
      %804 = vmatpush1.msra.mxu0 0.0
      %805 = vmatprep.subr.mxu0 0.0
      %806 = vmatpush1.msra.mxu0 0.0
      %807 = vmatprep.subr.mxu0 0.0
      %808 = vmatpush1.msra.mxu0 0.0
      %809 = vmatprep.subr.mxu0 0.0
      %810 = vmatpush1.msra.mxu0 0.0
      %811 = vmatprep.subr.mxu0 0.0
      %812 = vmatpush1.msra.mxu0 0.0
      %813 = vmatprep.subr.mxu0 0.0
      %814 = vmatpush1.msra.mxu0 0.0
      %815 = vmatprep.subr.mxu0 0.0
      %816 = vmatpush1.msra.mxu0 0.0
      %817 = vmatprep.subr.mxu0 0.0
      %818 = vmatpush1.msra.mxu0 0.0
      %819 = vmatprep.subr.mxu0 0.0
      %820 = vmatpush1.msra.mxu0 0.0
      %821 = vmatprep.subr.mxu0 0.0
      %822 = vmatpush1.msra.mxu0 0.0
      %823 = vmatprep.subr.mxu0 0.0
      %824 = vmatpush1.msra.mxu0 0.0
      %825 = vmatprep.subr.mxu0 0.0
      %826 = vmatpush1.msra.mxu0 0.0
      %827 = vmatprep.subr.mxu0 0.0
      %828 = vmatpush1.msra.mxu0 0.0
      %829 = vmatprep.subr.mxu0 0.0
      %830 = vmatpush1.msra.mxu0 0.0
      %831 = vmatprep.subr.mxu0 0.0
      %832 = vmatpush1.msra.mxu0 0.0
      %833 = vmatprep.subr.mxu0 0.0
      %834 = vmatpush1.msra.mxu0 0.0
      %835 = vmatprep.subr.mxu0 0.0
      %836 = vmatpush1.msra.mxu0 0.0
      %837 = vmatprep.subr.mxu0 0.0
      %838 = vmatpush1.msra.mxu0 0.0
      %839 = vmatprep.subr.mxu0 0.0
      %840 = vmatpush1.msra.mxu0 0.0
      %841 = vmatprep.subr.mxu0 0.0
      %842 = vmatpush1.msra.mxu0 0.0
      %843 = vmatprep.subr.mxu0 0.0
      %844 = vmatpush1.msra.mxu0 0.0
      %845 = vmatprep.subr.mxu0 0.0
      %846 = vmatpush1.msra.mxu0 0.0
      %847 = vmatprep.subr.mxu0 0.0
      %848 = vmatpush1.msra.mxu0 0.0
      %849 = vmatprep.subr.mxu0 0.0
      %850 = vmatpush1.msra.mxu0 0.0
      %851 = vmatprep.subr.mxu0 0.0
      %852 = vmatpush1.msra.mxu0 0.0
      %853 = vmatprep.mubr.f32.mxu0 0.0
      %854 = vmatmul.mubr.f32.gmra.mrb[0].mxu0 %v784
      %v855 = vpop.f32.mrb[0].mxu0
      %v856 = vadd.f32 %v782, %v855
      %v857 = vpop.f32.mrb[0].mxu0
      %858 = vmatprep.mubr.f32.mxu0 0.0
      %859 = vmatmul.mubr.f32.gmra.mrb[0].mxu0 %v787
      %v860 = vpop.f32.mrb[0].mxu0
      %v861 = vadd.f32 %v782, %v860
      %v862 = vpop.f32.mrb[0].mxu0
      %863 = vdwg.mxu0
      %vm864 = vcmp.gt.f32.partialorder %v856, 0.0
      %vm865 = vcmp.gt.f32.partialorder %v861, 0.0
      %v866 = vmul.f32 %v856, 0.01
      %v867 = vmul.f32 %v861, 0.01
      %v868 = vsel %vm864, %v856, %v866
      %v869 = vsel %vm865, %v861, %v867
      %v870 = vld [vmem:[%s193 + $0x20] sm:$0xff]
      %v871 = vld [vmem:[%s193 + $0x28] sm:$0xff]
      %v872 = vld [vmem:[%s2] ss:$8 sm:$0x3]
      %s873 = scalar_lea.vmem %s2, 1
      %v874 = vld [vmem:[%s873] ss:$8 sm:$0x3]
      %s875 = scalar_lea.vmem %s2, 2
      %v876 = vld [vmem:[%s875] ss:$8 sm:$0x3]
      %v878 = vlaneseq
      %v879 = vshrl.u32 %v878, 7
      %v880 = vsub.s32 0, %v879
      %v881 = vrot.slane %v872, %v880
      %v882 = vlaneseq
      %v883 = vshrl.u32 %v882, 7
      %v884 = vsub.s32 1, %v883
      %v885 = vrot.slane %v872, %v884
      %s888 = scalar_lea.vmem %s2, 16
      %v889 = vld [vmem:[%s888] ss:$8 sm:$0x3]
      %891 = vset.pattern.permute.xlu0 0
      %892 = vperm.xlu0 %891, %v870
      %v893 = vpop.permute.xlu0 %892
      %896 = vset.pattern.permute.xlu0 0
      %897 = vperm.xlu0 %896, %v871
      %v898 = vpop.permute.xlu0 %897
      %900 = vset.pattern.permute.xlu0 0
      %901 = vperm.xlu0 %900, %v584
      %v902 = vpop.permute.xlu0 %901
      %904 = vset.pattern.permute.xlu0 0
      %905 = vperm.xlu0 %904, %v585
      %v906 = vpop.permute.xlu0 %905
      %v909 = vlaneseq
      %v910 = vshrl.u32 %v909, 7
      %v911 = vsub.s32 0, %v910
      %v912 = vrot.slane %v889, %v911
      %v913 = vlaneseq
      %v914 = vshrl.u32 %v913, 7
      %v915 = vsub.s32 1, %v914
      %v916 = vrot.slane %v889, %v915
      %v919 = vmul.f32 %v893, %v912
      %v920 = vmul.f32 %v893, %v916
      %v921 = vmul.f32 %v898, %v912
      %v922 = vmul.f32 %v898, %v916
      %v923 = vmul.f32 %v902, %v912
      %v924 = vmul.f32 %v902, %v916
      %v925 = vmul.f32 %v906, %v912
      %v926 = vmul.f32 %v906, %v916
      %v927 = vadd.f32 %v881, %v919
      %v928 = vadd.f32 %v885, %v920
      %v929 = vadd.f32 %v881, %v921
      %v930 = vadd.f32 %v885, %v922
      %v931 = vadd.f32 %v881, %v923
      %v932 = vadd.f32 %v885, %v924
      %v933 = vadd.f32 %v881, %v925
      %v934 = vadd.f32 %v885, %v926
      %s935 = scalar_lea.vmem %s2, 17
      %v936 = vld [vmem:[%s935] ss:$8 sm:$0x3]
      %937 = vset.pattern.permute.xlu0 1
      %938 = vperm.xlu0 %937, %v870
      %v939 = vpop.permute.xlu0 %938
      %941 = vset.pattern.permute.xlu0 1
      %942 = vperm.xlu0 %941, %v871
      %v943 = vpop.permute.xlu0 %942
      %945 = vset.pattern.permute.xlu0 1
      %946 = vperm.xlu0 %945, %v584
      %v947 = vpop.permute.xlu0 %946
      %949 = vset.pattern.permute.xlu0 1
      %950 = vperm.xlu0 %949, %v585
      %v951 = vpop.permute.xlu0 %950
      %v954 = vlaneseq
      %v955 = vshrl.u32 %v954, 7
      %v956 = vsub.s32 0, %v955
      %v957 = vrot.slane %v936, %v956
      %v958 = vlaneseq
      %v959 = vshrl.u32 %v958, 7
      %v960 = vsub.s32 1, %v959
      %v961 = vrot.slane %v936, %v960
      %v964 = vmul.f32 %v939, %v957
      %v965 = vmul.f32 %v939, %v961
      %v966 = vmul.f32 %v943, %v957
      %v967 = vmul.f32 %v943, %v961
      %v968 = vmul.f32 %v947, %v957
      %v969 = vmul.f32 %v947, %v961
      %v970 = vmul.f32 %v951, %v957
      %v971 = vmul.f32 %v951, %v961
      %v972 = vadd.f32 %v927, %v964
      %v973 = vadd.f32 %v928, %v965
      %v974 = vadd.f32 %v929, %v966
      %v975 = vadd.f32 %v930, %v967
      %v976 = vadd.f32 %v931, %v968
      %v977 = vadd.f32 %v932, %v969
      %v978 = vadd.f32 %v933, %v970
      %v979 = vadd.f32 %v934, %v971
      %s980 = scalar_lea.vmem %s2, 18
      %v981 = vld [vmem:[%s980] ss:$8 sm:$0x3]
      %982 = vset.pattern.permute.xlu0 2
      %983 = vperm.xlu0 %982, %v870
      %v984 = vpop.permute.xlu0 %983
      %986 = vset.pattern.permute.xlu0 2
      %987 = vperm.xlu0 %986, %v871
      %v988 = vpop.permute.xlu0 %987
      %990 = vset.pattern.permute.xlu0 2
      %991 = vperm.xlu0 %990, %v584
      %v992 = vpop.permute.xlu0 %991
      %994 = vset.pattern.permute.xlu0 2
      %995 = vperm.xlu0 %994, %v585
      %v996 = vpop.permute.xlu0 %995
      %v999 = vlaneseq
      %v1000 = vshrl.u32 %v999, 7
      %v1001 = vsub.s32 0, %v1000
      %v1002 = vrot.slane %v981, %v1001
      %v1003 = vlaneseq
      %v1004 = vshrl.u32 %v1003, 7
      %v1005 = vsub.s32 1, %v1004
      %v1006 = vrot.slane %v981, %v1005
      %v1009 = vmul.f32 %v984, %v1002
      %v1010 = vmul.f32 %v984, %v1006
      %v1011 = vmul.f32 %v988, %v1002
      %v1012 = vmul.f32 %v988, %v1006
      %v1013 = vmul.f32 %v992, %v1002
      %v1014 = vmul.f32 %v992, %v1006
      %v1015 = vmul.f32 %v996, %v1002
      %v1016 = vmul.f32 %v996, %v1006
      %v1017 = vadd.f32 %v972, %v1009
      %v1018 = vadd.f32 %v973, %v1010
      %v1019 = vadd.f32 %v974, %v1011
      %v1020 = vadd.f32 %v975, %v1012
      %v1021 = vadd.f32 %v976, %v1013
      %v1022 = vadd.f32 %v977, %v1014
      %v1023 = vadd.f32 %v978, %v1015
      %v1024 = vadd.f32 %v979, %v1016
      %s1025 = scalar_lea.vmem %s2, 19
      %v1026 = vld [vmem:[%s1025] ss:$8 sm:$0x3]
      %1027 = vset.pattern.permute.xlu0 3
      %1028 = vperm.xlu0 %1027, %v870
      %v1029 = vpop.permute.xlu0 %1028
      %1031 = vset.pattern.permute.xlu0 3
      %1032 = vperm.xlu0 %1031, %v871
      %v1033 = vpop.permute.xlu0 %1032
      %1035 = vset.pattern.permute.xlu0 3
      %1036 = vperm.xlu0 %1035, %v584
      %v1037 = vpop.permute.xlu0 %1036
      %1039 = vset.pattern.permute.xlu0 3
      %1040 = vperm.xlu0 %1039, %v585
      %v1041 = vpop.permute.xlu0 %1040
      %v1044 = vlaneseq
      %v1045 = vshrl.u32 %v1044, 7
      %v1046 = vsub.s32 0, %v1045
      %v1047 = vrot.slane %v1026, %v1046
      %v1048 = vlaneseq
      %v1049 = vshrl.u32 %v1048, 7
      %v1050 = vsub.s32 1, %v1049
      %v1051 = vrot.slane %v1026, %v1050
      %v1054 = vmul.f32 %v1029, %v1047
      %v1055 = vmul.f32 %v1029, %v1051
      %v1056 = vmul.f32 %v1033, %v1047
      %v1057 = vmul.f32 %v1033, %v1051
      %v1058 = vmul.f32 %v1037, %v1047
      %v1059 = vmul.f32 %v1037, %v1051
      %v1060 = vmul.f32 %v1041, %v1047
      %v1061 = vmul.f32 %v1041, %v1051
      %v1062 = vadd.f32 %v1017, %v1054
      %v1063 = vadd.f32 %v1018, %v1055
      %v1064 = vadd.f32 %v1019, %v1056
      %v1065 = vadd.f32 %v1020, %v1057
      %v1066 = vadd.f32 %v1021, %v1058
      %v1067 = vadd.f32 %v1022, %v1059
      %v1068 = vadd.f32 %v1023, %v1060
      %v1069 = vadd.f32 %v1024, %v1061
      %s1070 = scalar_lea.vmem %s2, 20
      %v1071 = vld [vmem:[%s1070] ss:$8 sm:$0x3]
      %1072 = vset.pattern.permute.xlu0 4
      %1073 = vperm.xlu0 %1072, %v870
      %v1074 = vpop.permute.xlu0 %1073
      %1076 = vset.pattern.permute.xlu0 4
      %1077 = vperm.xlu0 %1076, %v871
      %v1078 = vpop.permute.xlu0 %1077
      %1080 = vset.pattern.permute.xlu0 4
      %1081 = vperm.xlu0 %1080, %v584
      %v1082 = vpop.permute.xlu0 %1081
      %1084 = vset.pattern.permute.xlu0 4
      %1085 = vperm.xlu0 %1084, %v585
      %v1086 = vpop.permute.xlu0 %1085
      %v1089 = vlaneseq
      %v1090 = vshrl.u32 %v1089, 7
      %v1091 = vsub.s32 0, %v1090
      %v1092 = vrot.slane %v1071, %v1091
      %v1093 = vlaneseq
      %v1094 = vshrl.u32 %v1093, 7
      %v1095 = vsub.s32 1, %v1094
      %v1096 = vrot.slane %v1071, %v1095
      %v1099 = vmul.f32 %v1074, %v1092
      %v1100 = vmul.f32 %v1074, %v1096
      %v1101 = vmul.f32 %v1078, %v1092
      %v1102 = vmul.f32 %v1078, %v1096
      %v1103 = vmul.f32 %v1082, %v1092
      %v1104 = vmul.f32 %v1082, %v1096
      %v1105 = vmul.f32 %v1086, %v1092
      %v1106 = vmul.f32 %v1086, %v1096
      %v1107 = vadd.f32 %v1062, %v1099
      %v1108 = vadd.f32 %v1063, %v1100
      %v1109 = vadd.f32 %v1064, %v1101
      %v1110 = vadd.f32 %v1065, %v1102
      %v1111 = vadd.f32 %v1066, %v1103
      %v1112 = vadd.f32 %v1067, %v1104
      %v1113 = vadd.f32 %v1068, %v1105
      %v1114 = vadd.f32 %v1069, %v1106
      %s1115 = scalar_lea.vmem %s2, 21
      %v1116 = vld [vmem:[%s1115] ss:$8 sm:$0x3]
      %1117 = vset.pattern.permute.xlu0 5
      %1118 = vperm.xlu0 %1117, %v870
      %v1119 = vpop.permute.xlu0 %1118
      %1121 = vset.pattern.permute.xlu0 5
      %1122 = vperm.xlu0 %1121, %v871
      %v1123 = vpop.permute.xlu0 %1122
      %1125 = vset.pattern.permute.xlu0 5
      %1126 = vperm.xlu0 %1125, %v584
      %v1127 = vpop.permute.xlu0 %1126
      %1129 = vset.pattern.permute.xlu0 5
      %1130 = vperm.xlu0 %1129, %v585
      %v1131 = vpop.permute.xlu0 %1130
      %v1134 = vlaneseq
      %v1135 = vshrl.u32 %v1134, 7
      %v1136 = vsub.s32 0, %v1135
      %v1137 = vrot.slane %v1116, %v1136
      %v1138 = vlaneseq
      %v1139 = vshrl.u32 %v1138, 7
      %v1140 = vsub.s32 1, %v1139
      %v1141 = vrot.slane %v1116, %v1140
      %v1144 = vmul.f32 %v1119, %v1137
      %v1145 = vmul.f32 %v1119, %v1141
      %v1146 = vmul.f32 %v1123, %v1137
      %v1147 = vmul.f32 %v1123, %v1141
      %v1148 = vmul.f32 %v1127, %v1137
      %v1149 = vmul.f32 %v1127, %v1141
      %v1150 = vmul.f32 %v1131, %v1137
      %v1151 = vmul.f32 %v1131, %v1141
      %v1152 = vadd.f32 %v1107, %v1144
      %v1153 = vadd.f32 %v1108, %v1145
      %v1154 = vadd.f32 %v1109, %v1146
      %v1155 = vadd.f32 %v1110, %v1147
      %v1156 = vadd.f32 %v1111, %v1148
      %v1157 = vadd.f32 %v1112, %v1149
      %v1158 = vadd.f32 %v1113, %v1150
      %v1159 = vadd.f32 %v1114, %v1151
      %s1160 = scalar_lea.vmem %s2, 22
      %v1161 = vld [vmem:[%s1160] ss:$8 sm:$0x3]
      %1162 = vset.pattern.permute.xlu0 6
      %1163 = vperm.xlu0 %1162, %v870
      %v1164 = vpop.permute.xlu0 %1163
      %1166 = vset.pattern.permute.xlu0 6
      %1167 = vperm.xlu0 %1166, %v871
      %v1168 = vpop.permute.xlu0 %1167
      %1170 = vset.pattern.permute.xlu0 6
      %1171 = vperm.xlu0 %1170, %v584
      %v1172 = vpop.permute.xlu0 %1171
      %1174 = vset.pattern.permute.xlu0 6
      %1175 = vperm.xlu0 %1174, %v585
      %v1176 = vpop.permute.xlu0 %1175
      %v1179 = vlaneseq
      %v1180 = vshrl.u32 %v1179, 7
      %v1181 = vsub.s32 0, %v1180
      %v1182 = vrot.slane %v1161, %v1181
      %v1183 = vlaneseq
      %v1184 = vshrl.u32 %v1183, 7
      %v1185 = vsub.s32 1, %v1184
      %v1186 = vrot.slane %v1161, %v1185
      %v1189 = vmul.f32 %v1164, %v1182
      %v1190 = vmul.f32 %v1164, %v1186
      %v1191 = vmul.f32 %v1168, %v1182
      %v1192 = vmul.f32 %v1168, %v1186
      %v1193 = vmul.f32 %v1172, %v1182
      %v1194 = vmul.f32 %v1172, %v1186
      %v1195 = vmul.f32 %v1176, %v1182
      %v1196 = vmul.f32 %v1176, %v1186
      %v1197 = vadd.f32 %v1152, %v1189
      %v1198 = vadd.f32 %v1153, %v1190
      %v1199 = vadd.f32 %v1154, %v1191
      %v1200 = vadd.f32 %v1155, %v1192
      %v1201 = vadd.f32 %v1156, %v1193
      %v1202 = vadd.f32 %v1157, %v1194
      %v1203 = vadd.f32 %v1158, %v1195
      %v1204 = vadd.f32 %v1159, %v1196
      %s1205 = scalar_lea.vmem %s2, 23
      %v1206 = vld [vmem:[%s1205] ss:$8 sm:$0x3]
      %1207 = vset.pattern.permute.xlu0 7
      %1208 = vperm.xlu0 %1207, %v870
      %v1209 = vpop.permute.xlu0 %1208
      %1211 = vset.pattern.permute.xlu0 7
      %1212 = vperm.xlu0 %1211, %v871
      %v1213 = vpop.permute.xlu0 %1212
      %1215 = vset.pattern.permute.xlu0 7
      %1216 = vperm.xlu0 %1215, %v584
      %v1217 = vpop.permute.xlu0 %1216
      %1219 = vset.pattern.permute.xlu0 7
      %1220 = vperm.xlu0 %1219, %v585
      %v1221 = vpop.permute.xlu0 %1220
      %v1224 = vlaneseq
      %v1225 = vshrl.u32 %v1224, 7
      %v1226 = vsub.s32 0, %v1225
      %v1227 = vrot.slane %v1206, %v1226
      %v1228 = vlaneseq
      %v1229 = vshrl.u32 %v1228, 7
      %v1230 = vsub.s32 1, %v1229
      %v1231 = vrot.slane %v1206, %v1230
      %v1234 = vmul.f32 %v1209, %v1227
      %v1235 = vmul.f32 %v1209, %v1231
      %v1236 = vmul.f32 %v1213, %v1227
      %v1237 = vmul.f32 %v1213, %v1231
      %v1238 = vmul.f32 %v1217, %v1227
      %v1239 = vmul.f32 %v1217, %v1231
      %v1240 = vmul.f32 %v1221, %v1227
      %v1241 = vmul.f32 %v1221, %v1231
      %v1242 = vadd.f32 %v1197, %v1234
      %v1243 = vadd.f32 %v1198, %v1235
      %v1244 = vadd.f32 %v1199, %v1236
      %v1245 = vadd.f32 %v1200, %v1237
      %v1246 = vadd.f32 %v1201, %v1238
      %v1247 = vadd.f32 %v1202, %v1239
      %v1248 = vadd.f32 %v1203, %v1240
      %v1249 = vadd.f32 %v1204, %v1241
      %vm1250 = vcmp.gt.f32.partialorder %v1242, 0.0
      %vm1251 = vcmp.gt.f32.partialorder %v1243, 0.0
      %vm1252 = vcmp.gt.f32.partialorder %v1244, 0.0
      %vm1253 = vcmp.gt.f32.partialorder %v1245, 0.0
      %vm1254 = vcmp.gt.f32.partialorder %v1246, 0.0
      %vm1255 = vcmp.gt.f32.partialorder %v1247, 0.0
      %vm1256 = vcmp.gt.f32.partialorder %v1248, 0.0
      %vm1257 = vcmp.gt.f32.partialorder %v1249, 0.0
      %v1258 = vmul.f32 %v1242, 0.01
      %v1259 = vmul.f32 %v1243, 0.01
      %v1260 = vmul.f32 %v1244, 0.01
      %v1261 = vmul.f32 %v1245, 0.01
      %v1262 = vmul.f32 %v1246, 0.01
      %v1263 = vmul.f32 %v1247, 0.01
      %v1264 = vmul.f32 %v1248, 0.01
      %v1265 = vmul.f32 %v1249, 0.01
      %v1266 = vsel %vm1250, %v1242, %v1258
      %v1267 = vsel %vm1251, %v1243, %v1259
      %v1268 = vsel %vm1252, %v1244, %v1260
      %v1269 = vsel %vm1253, %v1245, %v1261
      %v1270 = vsel %vm1254, %v1246, %v1262
      %v1271 = vsel %vm1255, %v1247, %v1263
      %v1272 = vsel %vm1256, %v1248, %v1264
      %v1273 = vsel %vm1257, %v1249, %v1265
      %v1274 = vpack.c.bf16 %v1268, %v1266
      %v1275 = vpack.c.bf16 %v1269, %v1267
      %v1276 = vpack.c.bf16 %v1272, %v1270
      %v1277 = vpack.c.bf16 %v1273, %v1271
      %v1278 = vld [vmem:[%s3] sm:$0xff]
      %v1279 = vld [vmem:[%s3 + $0x8] sm:$0xff]
      %v1280 = vld [vmem:[%s3 + $0x10] sm:$0xff]
      %v1281 = vld [vmem:[%s3 + $0x18] sm:$0xff]
      %v1282 = vld [vmem:[%s3 + $0x20] sm:$0xff]
      %v1283 = vld [vmem:[%s3 + $0x28] sm:$0xff]
      %v1284 = vld [vmem:[%s3 + $0x30] sm:$0xff]
      %v1285 = vld [vmem:[%s3 + $0x38] sm:$0xff]
      %v1286 = vld [vmem:[%s3 + $0x40] sm:$0xff]
      %v1287 = vld [vmem:[%s3 + $0x48] sm:$0xff]
      %v1288 = vld [vmem:[%s3 + $0x50] sm:$0xff]
      %v1289 = vld [vmem:[%s3 + $0x58] sm:$0xff]
      %v1290 = vld [vmem:[%s3 + $0x60] sm:$0xff]
      %v1291 = vld [vmem:[%s3 + $0x68] sm:$0xff]
      %v1292 = vld [vmem:[%s3 + $0x70] sm:$0xff]
      %v1293 = vld [vmem:[%s3 + $0x78] sm:$0xff]
      %v1294 = vld [vmem:[%s3 + $0x80] sm:$0xff]
      %v1295 = vld [vmem:[%s3 + $0x88] sm:$0xff]
      %v1296 = vld [vmem:[%s3 + $0x90] sm:$0xff]
      %v1297 = vld [vmem:[%s3 + $0x98] sm:$0xff]
      %v1298 = vld [vmem:[%s3 + $0xa0] sm:$0xff]
      %v1299 = vld [vmem:[%s3 + $0xa8] sm:$0xff]
      %v1300 = vld [vmem:[%s3 + $0xb0] sm:$0xff]
      %v1301 = vld [vmem:[%s3 + $0xb8] sm:$0xff]
      %v1302 = vld [vmem:[%s3 + $0xc0] sm:$0xff]
      %v1303 = vld [vmem:[%s3 + $0xc8] sm:$0xff]
      %v1304 = vld [vmem:[%s3 + $0xd0] sm:$0xff]
      %v1305 = vld [vmem:[%s3 + $0xd8] sm:$0xff]
      %v1306 = vld [vmem:[%s3 + $0xe0] sm:$0xff]
      %v1307 = vld [vmem:[%s3 + $0xe8] sm:$0xff]
      %v1308 = vld [vmem:[%s3 + $0xf0] sm:$0xff]
      %v1309 = vld [vmem:[%s3 + $0xf8] sm:$0xff]
      %v1311 = vlaneseq
      %v1312 = vshrl.u32 %v1311, 7
      %v1313 = vsub.s32 0, %v1312
      %v1314 = vrot.slane %v874, %v1313
      %v1315 = vlaneseq
      %v1316 = vshrl.u32 %v1315, 7
      %v1317 = vsub.s32 1, %v1316
      %v1318 = vrot.slane %v874, %v1317
      %v1353 = vunpack.c.l.b16 %v1278
      %v1354 = vunpack.c.h.b16 %v1278
      %v1355 = vunpack.c.l.b16 %v1279
      %v1356 = vunpack.c.h.b16 %v1279
      %v1357 = vunpack.c.l.b16 %v1280
      %v1358 = vunpack.c.h.b16 %v1280
      %v1359 = vunpack.c.l.b16 %v1281
      %v1360 = vunpack.c.h.b16 %v1281
      %v1361 = vunpack.c.l.b16 %v1282
      %v1362 = vunpack.c.h.b16 %v1282
      %v1363 = vunpack.c.l.b16 %v1283
      %v1364 = vunpack.c.h.b16 %v1283
      %v1365 = vunpack.c.l.b16 %v1284
      %v1366 = vunpack.c.h.b16 %v1284
      %v1367 = vunpack.c.l.b16 %v1285
      %v1368 = vunpack.c.h.b16 %v1285
      %v1369 = vunpack.c.l.b16 %v1286
      %v1370 = vunpack.c.h.b16 %v1286
      %v1371 = vunpack.c.l.b16 %v1287
      %v1372 = vunpack.c.h.b16 %v1287
      %v1373 = vunpack.c.l.b16 %v1288
      %v1374 = vunpack.c.h.b16 %v1288
      %v1375 = vunpack.c.l.b16 %v1289
      %v1376 = vunpack.c.h.b16 %v1289
      %v1377 = vunpack.c.l.b16 %v1290
      %v1378 = vunpack.c.h.b16 %v1290
      %v1379 = vunpack.c.l.b16 %v1291
      %v1380 = vunpack.c.h.b16 %v1291
      %v1381 = vunpack.c.l.b16 %v1292
      %v1382 = vunpack.c.h.b16 %v1292
      %v1383 = vunpack.c.l.b16 %v1293
      %v1384 = vunpack.c.h.b16 %v1293
      %v1385 = vunpack.c.l.b16 %v1294
      %v1386 = vunpack.c.h.b16 %v1294
      %v1387 = vunpack.c.l.b16 %v1295
      %v1388 = vunpack.c.h.b16 %v1295
      %v1389 = vunpack.c.l.b16 %v1296
      %v1390 = vunpack.c.h.b16 %v1296
      %v1391 = vunpack.c.l.b16 %v1297
      %v1392 = vunpack.c.h.b16 %v1297
      %v1393 = vunpack.c.l.b16 %v1298
      %v1394 = vunpack.c.h.b16 %v1298
      %v1395 = vunpack.c.l.b16 %v1299
      %v1396 = vunpack.c.h.b16 %v1299
      %v1397 = vunpack.c.l.b16 %v1300
      %v1398 = vunpack.c.h.b16 %v1300
      %v1399 = vunpack.c.l.b16 %v1301
      %v1400 = vunpack.c.h.b16 %v1301
      %v1401 = vunpack.c.l.b16 %v1302
      %v1402 = vunpack.c.h.b16 %v1302
      %v1403 = vunpack.c.l.b16 %v1303
      %v1404 = vunpack.c.h.b16 %v1303
      %v1405 = vunpack.c.l.b16 %v1304
      %v1406 = vunpack.c.h.b16 %v1304
      %v1407 = vunpack.c.l.b16 %v1305
      %v1408 = vunpack.c.h.b16 %v1305
      %v1409 = vunpack.c.l.b16 %v1306
      %v1410 = vunpack.c.h.b16 %v1306
      %v1411 = vunpack.c.l.b16 %v1307
      %v1412 = vunpack.c.h.b16 %v1307
      %v1413 = vunpack.c.l.b16 %v1308
      %v1414 = vunpack.c.h.b16 %v1308
      %v1415 = vunpack.c.l.b16 %v1309
      %v1416 = vunpack.c.h.b16 %v1309
      %v1417 = vpack.c.b16 %v1355, %v1353
      %v1418 = vpack.c.b16 %v1356, %v1354
      %v1419 = vpack.c.b16 %v1359, %v1357
      %v1420 = vpack.c.b16 %v1360, %v1358
      %v1421 = vpack.c.b16 %v1363, %v1361
      %v1422 = vpack.c.b16 %v1364, %v1362
      %v1423 = vpack.c.b16 %v1367, %v1365
      %v1424 = vpack.c.b16 %v1368, %v1366
      %v1425 = vpack.c.b16 %v1371, %v1369
      %v1426 = vpack.c.b16 %v1372, %v1370
      %v1427 = vpack.c.b16 %v1375, %v1373
      %v1428 = vpack.c.b16 %v1376, %v1374
      %v1429 = vpack.c.b16 %v1379, %v1377
      %v1430 = vpack.c.b16 %v1380, %v1378
      %v1431 = vpack.c.b16 %v1383, %v1381
      %v1432 = vpack.c.b16 %v1384, %v1382
      %v1433 = vpack.c.b16 %v1387, %v1385
      %v1434 = vpack.c.b16 %v1388, %v1386
      %v1435 = vpack.c.b16 %v1391, %v1389
      %v1436 = vpack.c.b16 %v1392, %v1390
      %v1437 = vpack.c.b16 %v1395, %v1393
      %v1438 = vpack.c.b16 %v1396, %v1394
      %v1439 = vpack.c.b16 %v1399, %v1397
      %v1440 = vpack.c.b16 %v1400, %v1398
      %v1441 = vpack.c.b16 %v1403, %v1401
      %v1442 = vpack.c.b16 %v1404, %v1402
      %v1443 = vpack.c.b16 %v1407, %v1405
      %v1444 = vpack.c.b16 %v1408, %v1406
      %v1445 = vpack.c.b16 %v1411, %v1409
      %v1446 = vpack.c.b16 %v1412, %v1410
      %v1447 = vpack.c.b16 %v1415, %v1413
      %v1448 = vpack.c.b16 %v1416, %v1414
      %1481 = vmatprep.subr.bf16.mxu0 %v1418
      %1482 = vmatpush1.bf16.msra.mxu0 %v1417
      %1483 = vmatprep.subr.bf16.mxu0 %v1420
      %1484 = vmatpush1.bf16.msra.mxu0 %v1419
      %1485 = vmatprep.subr.bf16.mxu0 %v1422
      %1486 = vmatpush1.bf16.msra.mxu0 %v1421
      %1487 = vmatprep.subr.bf16.mxu0 %v1424
      %1488 = vmatpush1.bf16.msra.mxu0 %v1423
      %1489 = vmatprep.subr.bf16.mxu0 %v1426
      %1490 = vmatpush1.bf16.msra.mxu0 %v1425
      %1491 = vmatprep.subr.bf16.mxu0 %v1428
      %1492 = vmatpush1.bf16.msra.mxu0 %v1427
      %1493 = vmatprep.subr.bf16.mxu0 %v1430
      %1494 = vmatpush1.bf16.msra.mxu0 %v1429
      %1495 = vmatprep.subr.bf16.mxu0 %v1432
      %1496 = vmatpush1.bf16.msra.mxu0 %v1431
      %1497 = vmatprep.subr.bf16.mxu0 %v1434
      %1498 = vmatpush1.bf16.msra.mxu0 %v1433
      %1499 = vmatprep.subr.bf16.mxu0 %v1436
      %1500 = vmatpush1.bf16.msra.mxu0 %v1435
      %1501 = vmatprep.subr.bf16.mxu0 %v1438
      %1502 = vmatpush1.bf16.msra.mxu0 %v1437
      %1503 = vmatprep.subr.bf16.mxu0 %v1440
      %1504 = vmatpush1.bf16.msra.mxu0 %v1439
      %1505 = vmatprep.subr.bf16.mxu0 %v1442
      %1506 = vmatpush1.bf16.msra.mxu0 %v1441
      %1507 = vmatprep.subr.bf16.mxu0 %v1444
      %1508 = vmatpush1.bf16.msra.mxu0 %v1443
      %1509 = vmatprep.subr.bf16.mxu0 %v1446
      %1510 = vmatpush1.bf16.msra.mxu0 %v1445
      %1511 = vmatprep.subr.bf16.mxu0 %v1448
      %1512 = vmatpush1.bf16.msra.mxu0 %v1447
      %1513 = vmatprep.mubr.bf16.mxu0 %v1275
      %1514 = vmatmul.mubr.bf16.gmra.mrb[0].mxu0 %v1274
      %v1515 = vpop.f32.mrb[0].mxu0
      %v1516 = vadd.f32 %v1314, %v1515
      %v1517 = vpop.f32.mrb[0].mxu0
      %v1518 = vadd.f32 %v1318, %v1517
      %v1519 = vpop.f32.mrb[0].mxu0
      %v1520 = vadd.f32 %v1314, %v1519
      %v1521 = vpop.f32.mrb[0].mxu0
      %v1522 = vadd.f32 %v1318, %v1521
      %1523 = vmatprep.mubr.bf16.mxu0 %v1277
      %1524 = vmatmul.mubr.bf16.gmra.mrb[0].mxu0 %v1276
      %v1525 = vpop.f32.mrb[0].mxu0
      %v1526 = vadd.f32 %v1314, %v1525
      %v1527 = vpop.f32.mrb[0].mxu0
      %v1528 = vadd.f32 %v1318, %v1527
      %v1529 = vpop.f32.mrb[0].mxu0
      %v1530 = vadd.f32 %v1314, %v1529
      %v1531 = vpop.f32.mrb[0].mxu0
      %v1532 = vadd.f32 %v1318, %v1531
      %1533 = vdwg.mxu0
      %vm1534 = vcmp.gt.f32.partialorder %v1516, 0.0
      %vm1535 = vcmp.gt.f32.partialorder %v1518, 0.0
      %vm1536 = vcmp.gt.f32.partialorder %v1520, 0.0
      %vm1537 = vcmp.gt.f32.partialorder %v1522, 0.0
      %vm1538 = vcmp.gt.f32.partialorder %v1526, 0.0
      %vm1539 = vcmp.gt.f32.partialorder %v1528, 0.0
      %vm1540 = vcmp.gt.f32.partialorder %v1530, 0.0
      %vm1541 = vcmp.gt.f32.partialorder %v1532, 0.0
      %v1542 = vmul.f32 %v1516, 0.01
      %v1543 = vmul.f32 %v1518, 0.01
      %v1544 = vmul.f32 %v1520, 0.01
      %v1545 = vmul.f32 %v1522, 0.01
      %v1546 = vmul.f32 %v1526, 0.01
      %v1547 = vmul.f32 %v1528, 0.01
      %v1548 = vmul.f32 %v1530, 0.01
      %v1549 = vmul.f32 %v1532, 0.01
      %v1550 = vsel %vm1534, %v1516, %v1542
      %v1551 = vsel %vm1535, %v1518, %v1543
      %v1552 = vsel %vm1536, %v1520, %v1544
      %v1553 = vsel %vm1537, %v1522, %v1545
      %v1554 = vsel %vm1538, %v1526, %v1546
      %v1555 = vsel %vm1539, %v1528, %v1547
      %v1556 = vsel %vm1540, %v1530, %v1548
      %v1557 = vsel %vm1541, %v1532, %v1549
      %v1559 = vlaneseq
      %v1560 = vshrl.u32 %v1559, 7
      %v1561 = vsub.s32 0, %v1560
      %v1562 = vrot.slane %v876, %v1561
      %v1563 = vlaneseq
      %v1564 = vshrl.u32 %v1563, 7
      %v1565 = vsub.s32 1, %v1564
      %v1566 = vrot.slane %v876, %v1565
      %v1569 = vmul.f32 %v1550, %v1562
      %v1570 = vmul.f32 %v1551, %v1566
      %v1571 = vmul.f32 %v1552, %v1562
      %v1572 = vmul.f32 %v1553, %v1566
      %v1573 = vmul.f32 %v1554, %v1562
      %v1574 = vmul.f32 %v1555, %v1566
      %v1575 = vmul.f32 %v1556, %v1562
      %v1576 = vmul.f32 %v1557, %v1566
      %v1577 = vadd.f32 %v1569, %v1570
      %1578 = vadd.xlane.f32.xlu0 %v1577
      %v1579 = vpop.xlane.xlu0 %1578
      %v1580 = vadd.f32 %v1571, %v1572
      %1581 = vadd.xlane.f32.xlu0 %v1580
      %v1582 = vpop.xlane.xlu0 %1581
      %v1583 = vadd.f32 %v1573, %v1574
      %1584 = vadd.xlane.f32.xlu0 %v1583
      %v1585 = vpop.xlane.xlu0 %1584
      %v1586 = vadd.f32 %v1575, %v1576
      %1587 = vadd.xlane.f32.xlu0 %v1586
      %v1588 = vpop.xlane.xlu0 %1587
      %v1589 = vadd.f32 %v1579, %v202
      %v1590 = vadd.f32 %v1582, %v202
      %v1591 = vadd.f32 %v1585, %v202
      %v1592 = vadd.f32 %v1588, %v202
      %v1593 = vsub.f32 0.0, %v1589
      %v1594 = vsub.f32 0.0, %v1590
      %v1595 = vsub.f32 0.0, %v1591
      %v1596 = vsub.f32 0.0, %v1592
      %v1597 = vmul.f32 %v1593, 1.442695
      %v1598 = vpow.pop %v1597
      %v1599 = vmul.f32 %v1594, 1.442695
      %v1600 = vpow.pop %v1599
      %v1601 = vmul.f32 %v1595, 1.442695
      %v1602 = vpow.pop %v1601
      %v1603 = vmul.f32 %v1596, 1.442695
      %v1604 = vpow.pop %v1603
      %v1605 = vadd.f32 %v1598, 1.0
      %v1606 = vadd.f32 %v1600, 1.0
      %v1607 = vadd.f32 %v1602, 1.0
      %v1608 = vadd.f32 %v1604, 1.0
      %v1609 = vrcp.pop %v1605
      %v1610 = vmul.f32 1.0, %v1609
      %v1611 = vrcp.pop %v1606
      %v1612 = vmul.f32 1.0, %v1611
      %v1613 = vrcp.pop %v1607
      %v1614 = vmul.f32 1.0, %v1613
      %v1615 = vrcp.pop %v1608
      %v1616 = vmul.f32 1.0, %v1615
      %v1617 = vld [vmem:[%s1 + $0xb8] sm:$0xff]
      %v1618 = vmul.f32 %v584, %v584
      %v1619 = vmul.f32 %v585, %v585
      %v1620 = vsel %vm592, %v1618, 0.0
      %1621 = vadd.xlane.f32.xlu0 %v1620
      %v1622 = vpop.xlane.xlu0 %1621
      %v1623 = vsel %vm592, %v1619, 0.0
      %1624 = vadd.xlane.f32.xlu0 %v1623
      %v1625 = vpop.xlane.xlu0 %1624
      %v1626 = vmul.f32 %v1617, %v1617
      %vm1627 = vcmask 31744
      %v1628 = vsel %vm1627, %v1626, 0.0
      %v1629 = vrot.slane %v1628, 4
      %v1630 = vadd.f32 %v1628, %v1629
      %v1631 = vrot.slane %v1630, 2
      %v1632 = vadd.f32 %v1630, %v1631
      %v1633 = vrot.slane %v1632, 1
      %v1634 = vadd.f32 %v1632, %v1633
      %1635 = vmatprep.subr.mxu0 0.0
      %1636 = vmatpush1.msra.mxu0 %v1617
      %1637 = vmatprep.subr.mxu0 0.0
      %1638 = vmatpush1.msra.mxu0 0.0
      %1639 = vmatprep.subr.mxu0 0.0
      %1640 = vmatpush1.msra.mxu0 0.0
      %1641 = vmatprep.subr.mxu0 0.0
      %1642 = vmatpush1.msra.mxu0 0.0
      %1643 = vmatprep.subr.mxu0 0.0
      %1644 = vmatpush1.msra.mxu0 0.0
      %1645 = vmatprep.subr.mxu0 0.0
      %1646 = vmatpush1.msra.mxu0 0.0
      %1647 = vmatprep.subr.mxu0 0.0
      %1648 = vmatpush1.msra.mxu0 0.0
      %1649 = vmatprep.subr.mxu0 0.0
      %1650 = vmatpush1.msra.mxu0 0.0
      %1651 = vmatprep.subr.mxu0 0.0
      %1652 = vmatpush1.msra.mxu0 0.0
      %1653 = vmatprep.subr.mxu0 0.0
      %1654 = vmatpush1.msra.mxu0 0.0
      %1655 = vmatprep.subr.mxu0 0.0
      %1656 = vmatpush1.msra.mxu0 0.0
      %1657 = vmatprep.subr.mxu0 0.0
      %1658 = vmatpush1.msra.mxu0 0.0
      %1659 = vmatprep.subr.mxu0 0.0
      %1660 = vmatpush1.msra.mxu0 0.0
      %1661 = vmatprep.subr.mxu0 0.0
      %1662 = vmatpush1.msra.mxu0 0.0
      %1663 = vmatprep.subr.mxu0 0.0
      %1664 = vmatpush1.msra.mxu0 0.0
      %1665 = vmatprep.subr.mxu0 0.0
      %1666 = vmatpush1.msra.mxu0 0.0
      %1667 = vmatprep.subr.mxu0 0.0
      %1668 = vmatpush1.msra.mxu0 0.0
      %1669 = vmatprep.subr.mxu0 0.0
      %1670 = vmatpush1.msra.mxu0 0.0
      %1671 = vmatprep.subr.mxu0 0.0
      %1672 = vmatpush1.msra.mxu0 0.0
      %1673 = vmatprep.subr.mxu0 0.0
      %1674 = vmatpush1.msra.mxu0 0.0
      %1675 = vmatprep.subr.mxu0 0.0
      %1676 = vmatpush1.msra.mxu0 0.0
      %1677 = vmatprep.subr.mxu0 0.0
      %1678 = vmatpush1.msra.mxu0 0.0
      %1679 = vmatprep.subr.mxu0 0.0
      %1680 = vmatpush1.msra.mxu0 0.0
      %1681 = vmatprep.subr.mxu0 0.0
      %1682 = vmatpush1.msra.mxu0 0.0
      %1683 = vmatprep.subr.mxu0 0.0
      %1684 = vmatpush1.msra.mxu0 0.0
      %1685 = vmatprep.subr.mxu0 0.0
      %1686 = vmatpush1.msra.mxu0 0.0
      %1687 = vmatprep.subr.mxu0 0.0
      %1688 = vmatpush1.msra.mxu0 0.0
      %1689 = vmatprep.subr.mxu0 0.0
      %1690 = vmatpush1.msra.mxu0 0.0
      %1691 = vmatprep.subr.mxu0 0.0
      %1692 = vmatpush1.msra.mxu0 0.0
      %1693 = vmatprep.subr.mxu0 0.0
      %1694 = vmatpush1.msra.mxu0 0.0
      %1695 = vmatprep.subr.mxu0 0.0
      %1696 = vmatpush1.msra.mxu0 0.0
      %1697 = vmatprep.subr.mxu0 0.0
      %1698 = vmatpush1.msra.mxu0 0.0
      %1699 = vmatprep.mubr.f32.mxu0 0.0
      %1700 = vmatmul.mubr.f32.gmra.mrb[0].mxu0 %v594
      %v1701 = vpop.f32.mrb[0].mxu0
      %v1702 = vadd.f32 0.0, %v1701
      %v1703 = vpop.f32.mrb[0].mxu0
      %1704 = vmatprep.mubr.f32.mxu0 0.0
      %1705 = vmatmul.mubr.f32.gmra.mrb[0].mxu0 %v597
      %v1706 = vpop.f32.mrb[0].mxu0
      %v1707 = vadd.f32 0.0, %v1706
      %v1708 = vpop.f32.mrb[0].mxu0
      %1709 = vdwg.mxu0
      %v1710 = vadd.f32 %v1622, %v1634
      %v1711 = vadd.f32 %v1625, %v1634
      %v1712 = vmul.f32 %v1702, 2.0
      %v1713 = vmul.f32 %v1707, 2.0
      %v1714 = vsub.f32 %v1710, %v1712
      %v1715 = vsub.f32 %v1711, %v1713
      %v1716 = vmax.f32 %v1714, 0.0
      %v1717 = vmax.f32 %v1715, 0.0
      %v1718 = vadd.f32 %v1716, 1.0
      %v1719 = vadd.f32 %v1717, 1.0
      %v1720 = vrcp.pop %v1718
      %v1721 = vmul.f32 1.0, %v1720
      %v1722 = vrcp.pop %v1719
      %v1723 = vmul.f32 1.0, %v1722
      %v1724 = vsel %vm1627, %v1721, 0.0
      %1725 = vadd.xlane.f32.xlu0 %v1724
      %v1726 = vpop.xlane.xlu0 %1725
      %v1727 = vsel %vm1627, %v1723, 0.0
      %1728 = vadd.xlane.f32.xlu0 %v1727
      %v1729 = vpop.xlane.xlu0 %1728
      %v1730 = vrcp.pop %v1726
      %v1731 = vmul.f32 %v1721, %v1730
      %v1732 = vrcp.pop %v1729
      %v1733 = vmul.f32 %v1723, %v1732
      %1736 = vrot.lane.b32.xlu0 %v1731, 16
      %v1737 = vpop.permute.xlu0 %1736
      %1738 = vrot.lane.b32.xlu0 %v1733, 16
      %v1739 = vpop.permute.xlu0 %1738
      %1744 = vrot.lane.b32.xlu0 %v1610, 20
      %v1745 = vpop.permute.xlu0 %1744
      %1746 = vrot.lane.b32.xlu0 %v1612, 20
      %v1747 = vpop.permute.xlu0 %1746
      %1752 = vrot.lane.b32.xlu0 %v1614, 21
      %v1753 = vpop.permute.xlu0 %1752
      %1754 = vrot.lane.b32.xlu0 %v1616, 21
      %v1755 = vpop.permute.xlu0 %1754
      %v1758 = vsel %vm213, %v868, %v1737
      %v1759 = vsel %vm213, %v869, %v1739
      %vm1760 = vcmask 162816
      %v1761 = vsel %vm1760, %v1758, %v1745
      %v1762 = vsel %vm1760, %v1759, %v1747
      %vm1763 = vcmask 171008
      %v1764 = vsel %vm1763, %v1761, %v1753
      %v1765 = vsel %vm1763, %v1762, %v1755
      %vm1766 = vcmask 179200
      %v1767 = vsel %vm1766, %v1764, 0.0
      %v1768 = vsel %vm1766, %v1765, 0.0
      %1769 = vst [vmem:[%s199] sm:$0xff] %v1767
      %1770 = vst [vmem:[%s199 + $0x8] sm:$0xff] %v1768
      %s1771 = smul.u32 2, %s15
      %p1772 = scmp.lt.s32.totalorder %s1771, 7
      %s1773 = scalar_select %p1772, %s1771, 7
      %s1774 = smul.addr %s1773, 8
      %s1775 = scalar_lea.vmem %s4, %s1774
      // Predicated region
      $region37: #{gdec_forward.1} parent=35 // pred_check
        %p1776 = pneg %p122
      $region38: #{gdec_forward.1} parent=35 // pred_check_branch
        %1778 = sbr.rel (%p1776) target = $region40
      $region39: #{gdec_forward.1} parent=35 // pred_region
        %s1779 = smul.u32 2, %s15
      $region40: #{gdec_forward.1} parent=35 // pred_fallthru
        _
    $region36: #{gdec_forward.1} parent=5 // pred_fallthru
      _
    %p1780 = scmp.le.s32.totalorder 2, %s10
    // Predicated region
    $region41: #{gdec_forward.1} parent=5 // pred_check
      %p1781 = pneg %p1780
    $region42: #{gdec_forward.1} parent=5 // pred_check_branch
      %1783 = sbr.rel (%p1781) target = $region44
    $region43: #{gdec_forward.1} parent=5 // pred_region
      %s1784 = ssub.s32 %s10, 2
      // Predicated region
      $region45: #{gdec_forward.1} parent=43 // pred_check
        %p1785 = pneg %p128
      $region46: #{gdec_forward.1} parent=43 // pred_check_branch
        %1787 = sbr.rel (%p1785) target = $region48
      $region47: #{gdec_forward.1} parent=43 // pred_region
        %s1788 = smul.u32 2, %s16
        %p1789 = scmp.lt.s32.totalorder %s1788, 7
        %s1790 = scalar_select %p1789, %s1788, 7
        %s1791 = smul.addr %s1790, 8
        %s1792 = scalar_lea.vmem %s4, %s1791
      $region48: #{gdec_forward.1} parent=43 // pred_fallthru
        _
    $region44: #{gdec_forward.1} parent=5 // pred_fallthru
      _
  $region6: #{gdec_forward.1} parent=0 // loop_footer
    %s14 = sadd.s32 1, %s10
  $region7: #{gdec_forward.1} parent=0 // loop_footer_branch
    %9 = sbr.rel target = $region3
  $region8: #{gdec_forward.1} parent=0 // loop_exit
    _

</llo_original>
